<compile_context>
chip_gen: v7x
topology: tpu7x:2x2x1
jax: 0.10.0
libtpu: 0.0.40
codegen_flags: <defaults>
</compile_context>

<pallas_src>
import jax
import jax.numpy as jnp
from jax.experimental import pallas as pl
from jax.experimental.pallas import tpu as pltpu

_VMEM_LIMIT = 32 * 1024 * 1024  # conservative scoped-VMEM budget (fits v5e/v6e/v7x)


# -----------------------------------------------------------------------------
# Fused kernel: one grid step == one batch image.  All intermediates stay in
# VMEM / registers; only the input volume, two noise volumes and the final
# (oc, hw) image cross HBM.
# -----------------------------------------------------------------------------
def _fused_deepvoxels_kernel(x_ref, n1_ref, n2_ref, wd_ref, bd_ref,
                             wr_ref, br_ref, o_ref):
    x = x_ref[0]                                   # (c, d, hw) — minor dims (16, 256) dense
    n1 = n1_ref[0]
    n2 = n2_ref[0]

    # --- noise injection (exact reference semantics) --------------------------
    gau = 0.05 + 0.03 * n1 + x
    poi = 0.03 * n2 * gau + gau

    # --- per-(b, c) min/max normalize over d*h*w -------------------------------
    mn = jnp.min(jnp.min(poi, axis=2, keepdims=True), axis=1, keepdims=True)
    z = poi - mn
    mx = jnp.max(jnp.max(z, axis=2, keepdims=True), axis=1, keepdims=True)
    norm = z * (1.0 / (mx + 1e-15))                # reciprocal on (c,1,1), broadcast multiply

    # --- Transient2volumn stand-in: 1x1x1 channel mix on the VPU ---------------
    # TODO(synk): real Transient2volumn (strided conv) source not provided.
    wd = wd_ref[...]                               # (feat, cin)
    feat = wd.shape[0]
    cin = wd.shape[1]
    tfre = bd_ref[...][:, :, None]                 # (feat, 1, 1) bias
    for ci in range(cin):                          # cin == 3 -> broadcast-MAC, not MXU
        tfre = tfre + wd[:, ci:ci + 1, None] * norm[ci:ci + 1]

    # TODO(synk): lct ('fk' light-cone transform) source not provided; identity.
    # The reference x[:, :, :zdim] slice is a no-op.

    # --- ReLU + per-(b, c) min/max normalize -----------------------------------
    a = jnp.maximum(tfre, 0.0)                     # (feat, d, hw)
    mn2 = jnp.min(jnp.min(a, axis=2, keepdims=True), axis=1, keepdims=True)
    z2 = a - mn2
    mx2 = jnp.max(jnp.max(z2, axis=2, keepdims=True), axis=1, keepdims=True)
    vnorm = z2 * (1.0 / (mx2 + 1e-15))

    # --- VisibleNet stand-in: max + mean pooling over depth --------------------
    # TODO(synk): real VisibleNet source not provided.
    pmax = jnp.max(vnorm, axis=1)                  # (feat, hw)
    pmean = jnp.mean(vnorm, axis=1)                # (feat, hw)

    # --- Rendering + depth Rendering stand-ins: fused per-pixel projection -----
    # TODO(synk): real Rendering source not provided; factor = sres = 1 -> no upsample.
    # wr columns [0:feat] act on the max-pool half, [feat:2*feat] on the mean half
    # (equivalent to concat([pmax, pmean]) @ wr.T without materializing the concat).
    wr = wr_ref[...]                               # (oc, 2*feat)
    y = br_ref[...]                                # (oc, 1) -> broadcasts to (oc, hw)
    for fi in range(feat):
        y = y + wr[:, fi:fi + 1] * pmax[fi:fi + 1]
        y = y + wr[:, feat + fi:feat + fi + 1] * pmean[fi:fi + 1]

    # --- clamp(0, 1) * 2 - 1 epilogue ------------------------------------------
    o_ref[0] = (jnp.clip(y, 0.0, 1.0) * 2.0 - 1.0).astype(o_ref.dtype)


def deepvoxels_forward(x_bcdhw, noise1, noise2, w_down, b_down, w_render, b_render):
    b, c, d, h, w = x_bcdhw.shape
    hw = h * w
    feat = w_down.shape[0]
    oc = w_render.shape[0]

    # Contiguous (free) reshapes only — depth stays on the sublane axis.
    xr = x_bcdhw.reshape(b, c, d, hw)
    n1r = noise1.reshape(b, c, d, hw)
    n2r = noise2.reshape(b, c, d, hw)

    vol_spec = pl.BlockSpec((1, c, d, hw), lambda i: (i, 0, 0, 0))

    out = pl.pallas_call(
        _fused_deepvoxels_kernel,
        out_shape=jax.ShapeDtypeStruct((b, oc, hw), x_bcdhw.dtype),
        grid=(b,),
        in_specs=[
            vol_spec,                                       # input volume
            vol_spec,                                       # noise 1
            vol_spec,                                       # noise 2
            pl.BlockSpec((feat, c), lambda i: (0, 0)),      # downnet weight
            pl.BlockSpec((feat, 1), lambda i: (0, 0)),      # downnet bias
            pl.BlockSpec((oc, 2 * feat), lambda i: (0, 0)),  # render+depth weight
            pl.BlockSpec((oc, 1), lambda i: (0, 0)),        # render+depth bias
        ],
        out_specs=pl.BlockSpec((1, oc, hw), lambda i: (i, 0, 0)),
        # Batch axis kept as a "parallel" grid axis (one image per step) so v7x can
        # shard it across TensorCores; on single-TC chips it is a 2-step serial loop
        # whose fixed cost is now paid once per forward (single pallas_call).
        compiler_params=pltpu.CompilerParams(
            dimension_semantics=("parallel",),
            vmem_limit_bytes=_VMEM_LIMIT),
    )(xr, n1r, n2r, w_down, b_down, w_render, b_render)
    return out.reshape(b, oc, h, w)


# -----------------------------------------------------------------------------
# DeepVoxels forward (Pallas).
# -----------------------------------------------------------------------------
class DeepVoxelsPallas:
    def __init__(self, nf0=4, in_channels=3, out_channels=2,
                 img_sidelength=16, grid_dim=16, key=jax.random.PRNGKey(42)):
        assert out_channels in (2, 6)
        self.basedim = nf0
        self.sres = img_sidelength // grid_dim            # = 1 in the small config
        feat = nf0 + 1                                     # basedim*1 + 1
        layernum = 0
        vis = feat * (layernum // 2 * 2 + 1 + 1)           # = 2 * feat
        self.feat, self.vis = feat, vis
        self.out_channels = out_channels

        k1, k2, k3 = jax.random.split(key, 3)
        s = 0.1
        # Channel-first weights: (out_ch, in_ch) so kernels stay lane-dense.
        self.w_down = (s * jax.random.normal(k1, (feat, in_channels))).astype(jnp.float32)
        self.b_down = jnp.zeros((feat, 1), jnp.float32)
        oc_half = out_channels // 2
        w_rend = (s * jax.random.normal(k2, (oc_half, vis))).astype(jnp.float32)
        w_dep = (s * jax.random.normal(k3, (oc_half, vis))).astype(jnp.float32)
        # Fused rendering + depth projection (rows [0:oc/2] = rendered, [oc/2:] = depth).
        self.w_render_all = jnp.concatenate([w_rend, w_dep], axis=0)  # (oc, vis)
        self.b_render_all = jnp.zeros((out_channels, 1), jnp.float32)

        self._forward = jax.jit(deepvoxels_forward)

    def __call__(self, input_voxel, noise_key):
        # torch.randn_like equivalents, drawn host-side (portable; in-kernel TPU PRNG
        # primitives do not lower in interpret/CPU environments).
        k1, k2 = jax.random.split(noise_key)
        n1 = jax.random.normal(k1, input_voxel.shape, input_voxel.dtype)
        n2 = jax.random.normal(k2, input_voxel.shape, input_voxel.dtype)
        return self._forward(input_voxel, n1, n2, self.w_down, self.b_down,
                             self.w_render_all, self.b_render_all)


# -----------------------------------------------------------------------------
# Pure-JAX reference (same math, un-fused) for correctness checking.
# -----------------------------------------------------------------------------
def _reference_forward(x, n1, n2, w_down, b_down, w_render, b_render):
    b, c, d, h, w = x.shape
    gau = 0.05 + 0.03 * n1 + x
    poi = 0.03 * n2 * gau + gau

    def norm_bc(v):
        vk = v.reshape(b, v.shape[1], -1)
        mn = vk.min(axis=2, keepdims=True)
        z = vk - mn
        mx = z.max(axis=2, keepdims=True)
        return (z / (mx + 1e-15)).reshape(v.shape)

    dn = norm_bc(poi)
    tfre = jnp.einsum('fc,bcdhw->bfdhw', w_down, dn) + b_down.reshape(1, -1, 1, 1, 1)
    a = jax.nn.relu(tfre)
    an = norm_bc(a)
    vis = jnp.concatenate([an.max(axis=2), an.mean(axis=2)], axis=1)
    y = jnp.einsum('ov,bvhw->bohw', w_render, vis) + b_render.reshape(1, -1, 1, 1)
    return jnp.clip(y, 0.0, 1.0) * 2.0 - 1.0


if __name__ == "__main__":
    key = jax.random.PRNGKey(0)
    k_in, k_noise, k_param = jax.random.split(key, 3)

    # Small shapes consistent with the module: batch=2, in_channels=3,
    # depth=16, spatial=16x16 (img_sidelength=16, grid_dim=16 -> sres=1).
    input_voxel = jax.random.uniform(k_in, (2, 3, 16, 16, 16), jnp.float32)

    model = DeepVoxelsPallas(nf0=4, in_channels=3, out_channels=2,
                             img_sidelength=16, grid_dim=16, key=k_param)

    out = jax.block_until_ready(model(input_voxel, k_noise))
    assert out.shape == (2, 2, 16, 16), out.shape

    # Validate against the pure-JAX reference using the same noise draws.
    kn1, kn2 = jax.random.split(k_noise)
    noise1 = jax.random.normal(kn1, input_voxel.shape, input_voxel.dtype)
    noise2 = jax.random.normal(kn2, input_voxel.shape, input_voxel.dtype)
    ref = _reference_forward(input_voxel, noise1, noise2, model.w_down, model.b_down,
                             model.w_render_all, model.b_render_all)
    max_err = float(jnp.max(jnp.abs(out - ref)))
    assert jnp.allclose(out, ref, rtol=1e-4, atol=1e-4), max_err
    assert bool(jnp.all(jnp.isfinite(out)))
    assert bool(jnp.all(out >= -1.0)) and bool(jnp.all(out <= 1.0))
    print("KERNEL_OK")
</pallas_src>

<mosaic_0001>
module attributes {stable_mosaic.version = 11 : i64} {
  func.func @_fused_deepvoxels_kernel(%arg0: i32, %arg1: memref<1x3x16x256xf32, #tpu.memory_space<vmem>>, %arg2: memref<1x3x16x256xf32, #tpu.memory_space<vmem>>, %arg3: memref<1x3x16x256xf32, #tpu.memory_space<vmem>>, %arg4: memref<5x3xf32, #tpu.memory_space<vmem>>, %arg5: memref<5x1xf32, #tpu.memory_space<vmem>>, %arg6: memref<2x10xf32, #tpu.memory_space<vmem>>, %arg7: memref<2x1xf32, #tpu.memory_space<vmem>>, %arg8: memref<1x2x256xf32, #tpu.memory_space<vmem>>) attributes {dimension_semantics = [#tpu.dimension_semantics<parallel>], iteration_bounds = array<i64: 2>, scalar_prefetch = 0 : i64, scratch_operands = 0 : i64, tpu.core_type = #tpu.core_type<tc>, window_params = [{transform_indices = @transform_0, window_bounds = array<i64: 1, 3, 16, 256>}, {transform_indices = @transform_1, window_bounds = array<i64: 1, 3, 16, 256>}, {transform_indices = @transform_2, window_bounds = array<i64: 1, 3, 16, 256>}, {pipeline_mode = #tpu.pipeline_mode<synchronous>, transform_indices = @transform_3, window_bounds = array<i64: 5, 3>}, {pipeline_mode = #tpu.pipeline_mode<synchronous>, transform_indices = @transform_4, window_bounds = array<i64: 5, 1>}, {pipeline_mode = #tpu.pipeline_mode<synchronous>, transform_indices = @transform_5, window_bounds = array<i64: 2, 10>}, {pipeline_mode = #tpu.pipeline_mode<synchronous>, transform_indices = @transform_6, window_bounds = array<i64: 2, 1>}, {transform_indices = @transform_7, window_bounds = array<i64: 1, 2, 256>}]} {
    %c0 = arith.constant 0 : index
    %c0_0 = arith.constant 0 : index
    %c0_1 = arith.constant 0 : index
    %c0_2 = arith.constant 0 : index
    %0 = vector.load %arg1[%c0, %c0_0, %c0_1, %c0_2] : memref<1x3x16x256xf32, #tpu.memory_space<vmem>>, vector<1x3x16x256xf32>
    %1 = vector.shape_cast %0 : vector<1x3x16x256xf32> to vector<3x16x256xf32>
    %c0_3 = arith.constant 0 : index
    %c0_4 = arith.constant 0 : index
    %c0_5 = arith.constant 0 : index
    %c0_6 = arith.constant 0 : index
    %2 = vector.load %arg2[%c0_3, %c0_4, %c0_5, %c0_6] : memref<1x3x16x256xf32, #tpu.memory_space<vmem>>, vector<1x3x16x256xf32>
    %3 = vector.shape_cast %2 : vector<1x3x16x256xf32> to vector<3x16x256xf32>
    %c0_7 = arith.constant 0 : index
    %c0_8 = arith.constant 0 : index
    %c0_9 = arith.constant 0 : index
    %c0_10 = arith.constant 0 : index
    %4 = vector.load %arg3[%c0_7, %c0_8, %c0_9, %c0_10] : memref<1x3x16x256xf32, #tpu.memory_space<vmem>>, vector<1x3x16x256xf32>
    %5 = vector.shape_cast %4 : vector<1x3x16x256xf32> to vector<3x16x256xf32>
    %cst = arith.constant 3.000000e-02 : f32
    %6 = vector.broadcast %cst : f32 to vector<3x16x256xf32>
    %7 = arith.mulf %6, %3 : vector<3x16x256xf32>
    %cst_11 = arith.constant 5.000000e-02 : f32
    %8 = vector.broadcast %cst_11 : f32 to vector<3x16x256xf32>
    %9 = arith.addf %8, %7 : vector<3x16x256xf32>
    %10 = arith.addf %9, %1 : vector<3x16x256xf32>
    %cst_12 = arith.constant 3.000000e-02 : f32
    %11 = vector.broadcast %cst_12 : f32 to vector<3x16x256xf32>
    %12 = arith.mulf %11, %5 : vector<3x16x256xf32>
    %13 = arith.mulf %12, %10 : vector<3x16x256xf32>
    %14 = arith.addf %13, %10 : vector<3x16x256xf32>
    %cst_13 = arith.constant dense<0x7F800000> : vector<3x16xf32>
    %15 = vector.multi_reduction <minimumf>, %14, %cst_13 [2] : vector<3x16x256xf32> to vector<3x16xf32>
    %16 = vector.shape_cast %15 : vector<3x16xf32> to vector<3x16x1xf32>
    %cst_14 = arith.constant dense<0x7F800000> : vector<3x1xf32>
    %17 = vector.multi_reduction <minimumf>, %16, %cst_14 [1] : vector<3x16x1xf32> to vector<3x1xf32>
    %18 = vector.shape_cast %17 : vector<3x1xf32> to vector<3x1x1xf32>
    %19 = vector.broadcast %18 : vector<3x1x1xf32> to vector<3x16x256xf32>
    %20 = arith.subf %14, %19 : vector<3x16x256xf32>
    %cst_15 = arith.constant dense<0xFF800000> : vector<3x16xf32>
    %21 = vector.multi_reduction <maximumf>, %20, %cst_15 [2] : vector<3x16x256xf32> to vector<3x16xf32>
    %22 = vector.shape_cast %21 : vector<3x16xf32> to vector<3x16x1xf32>
    %cst_16 = arith.constant dense<0xFF800000> : vector<3x1xf32>
    %23 = vector.multi_reduction <maximumf>, %22, %cst_16 [1] : vector<3x16x1xf32> to vector<3x1xf32>
    %24 = vector.shape_cast %23 : vector<3x1xf32> to vector<3x1x1xf32>
    %cst_17 = arith.constant 1.000000e-15 : f32
    %25 = vector.broadcast %cst_17 : f32 to vector<3x1x1xf32>
    %26 = arith.addf %24, %25 : vector<3x1x1xf32>
    %cst_18 = arith.constant 1.000000e+00 : f32
    %27 = vector.broadcast %cst_18 : f32 to vector<3x1x1xf32>
    %28 = arith.divf %27, %26 : vector<3x1x1xf32>
    %29 = vector.broadcast %28 : vector<3x1x1xf32> to vector<3x16x256xf32>
    %30 = arith.mulf %20, %29 : vector<3x16x256xf32>
    %c0_19 = arith.constant 0 : index
    %c0_20 = arith.constant 0 : index
    %31 = vector.load %arg4[%c0_19, %c0_20] : memref<5x3xf32, #tpu.memory_space<vmem>>, vector<5x3xf32>
    %c0_21 = arith.constant 0 : index
    %c0_22 = arith.constant 0 : index
    %32 = vector.load %arg5[%c0_21, %c0_22] : memref<5x1xf32, #tpu.memory_space<vmem>>, vector<5x1xf32>
    %33 = vector.shape_cast %32 : vector<5x1xf32> to vector<5x1x1xf32>
    %34 = vector.extract_strided_slice %31 {offsets = [0, 0], sizes = [5, 1], strides = [1, 1]} : vector<5x3xf32> to vector<5x1xf32>
    %35 = vector.shape_cast %34 : vector<5x1xf32> to vector<5x1x1xf32>
    %36 = vector.extract_strided_slice %30 {offsets = [0, 0, 0], sizes = [1, 16, 256], strides = [1, 1, 1]} : vector<3x16x256xf32> to vector<1x16x256xf32>
    %37 = vector.broadcast %35 : vector<5x1x1xf32> to vector<5x16x256xf32>
    %38 = vector.broadcast %36 : vector<1x16x256xf32> to vector<5x16x256xf32>
    %39 = arith.mulf %37, %38 : vector<5x16x256xf32>
    %40 = vector.broadcast %33 : vector<5x1x1xf32> to vector<5x16x256xf32>
    %41 = arith.addf %40, %39 : vector<5x16x256xf32>
    %42 = vector.extract_strided_slice %31 {offsets = [0, 1], sizes = [5, 1], strides = [1, 1]} : vector<5x3xf32> to vector<5x1xf32>
    %43 = vector.shape_cast %42 : vector<5x1xf32> to vector<5x1x1xf32>
    %44 = vector.extract_strided_slice %30 {offsets = [1, 0, 0], sizes = [1, 16, 256], strides = [1, 1, 1]} : vector<3x16x256xf32> to vector<1x16x256xf32>
    %45 = vector.broadcast %43 : vector<5x1x1xf32> to vector<5x16x256xf32>
    %46 = vector.broadcast %44 : vector<1x16x256xf32> to vector<5x16x256xf32>
    %47 = arith.mulf %45, %46 : vector<5x16x256xf32>
    %48 = arith.addf %41, %47 : vector<5x16x256xf32>
    %49 = vector.extract_strided_slice %31 {offsets = [0, 2], sizes = [5, 1], strides = [1, 1]} : vector<5x3xf32> to vector<5x1xf32>
    %50 = vector.shape_cast %49 : vector<5x1xf32> to vector<5x1x1xf32>
    %51 = vector.extract_strided_slice %30 {offsets = [2, 0, 0], sizes = [1, 16, 256], strides = [1, 1, 1]} : vector<3x16x256xf32> to vector<1x16x256xf32>
    %52 = vector.broadcast %50 : vector<5x1x1xf32> to vector<5x16x256xf32>
    %53 = vector.broadcast %51 : vector<1x16x256xf32> to vector<5x16x256xf32>
    %54 = arith.mulf %52, %53 : vector<5x16x256xf32>
    %55 = arith.addf %48, %54 : vector<5x16x256xf32>
    %cst_23 = arith.constant 0.000000e+00 : f32
    %56 = vector.broadcast %cst_23 : f32 to vector<5x16x256xf32>
    %57 = arith.maximumf %55, %56 : vector<5x16x256xf32>
    %cst_24 = arith.constant dense<0x7F800000> : vector<5x16xf32>
    %58 = vector.multi_reduction <minimumf>, %57, %cst_24 [2] : vector<5x16x256xf32> to vector<5x16xf32>
    %59 = vector.shape_cast %58 : vector<5x16xf32> to vector<5x16x1xf32>
    %cst_25 = arith.constant dense<0x7F800000> : vector<5x1xf32>
    %60 = vector.multi_reduction <minimumf>, %59, %cst_25 [1] : vector<5x16x1xf32> to vector<5x1xf32>
    %61 = vector.shape_cast %60 : vector<5x1xf32> to vector<5x1x1xf32>
    %62 = vector.broadcast %61 : vector<5x1x1xf32> to vector<5x16x256xf32>
    %63 = arith.subf %57, %62 : vector<5x16x256xf32>
    %cst_26 = arith.constant dense<0xFF800000> : vector<5x16xf32>
    %64 = vector.multi_reduction <maximumf>, %63, %cst_26 [2] : vector<5x16x256xf32> to vector<5x16xf32>
    %65 = vector.shape_cast %64 : vector<5x16xf32> to vector<5x16x1xf32>
    %cst_27 = arith.constant dense<0xFF800000> : vector<5x1xf32>
    %66 = vector.multi_reduction <maximumf>, %65, %cst_27 [1] : vector<5x16x1xf32> to vector<5x1xf32>
    %67 = vector.shape_cast %66 : vector<5x1xf32> to vector<5x1x1xf32>
    %cst_28 = arith.constant 1.000000e-15 : f32
    %68 = vector.broadcast %cst_28 : f32 to vector<5x1x1xf32>
    %69 = arith.addf %67, %68 : vector<5x1x1xf32>
    %cst_29 = arith.constant 1.000000e+00 : f32
    %70 = vector.broadcast %cst_29 : f32 to vector<5x1x1xf32>
    %71 = arith.divf %70, %69 : vector<5x1x1xf32>
    %72 = vector.broadcast %71 : vector<5x1x1xf32> to vector<5x16x256xf32>
    %73 = arith.mulf %63, %72 : vector<5x16x256xf32>
    %cst_30 = arith.constant dense<0xFF800000> : vector<5x256xf32>
    %74 = vector.multi_reduction <maximumf>, %73, %cst_30 [1] : vector<5x16x256xf32> to vector<5x256xf32>
    %cst_31 = arith.constant dense<0.000000e+00> : vector<5x256xf32>
    %75 = vector.multi_reduction <add>, %73, %cst_31 [1] : vector<5x16x256xf32> to vector<5x256xf32>
    %cst_32 = arith.constant 1.600000e+01 : f32
    %76 = vector.broadcast %cst_32 : f32 to vector<5x256xf32>
    %77 = arith.divf %75, %76 : vector<5x256xf32>
    %c0_33 = arith.constant 0 : index
    %c0_34 = arith.constant 0 : index
    %78 = vector.load %arg6[%c0_33, %c0_34] : memref<2x10xf32, #tpu.memory_space<vmem>>, vector<2x10xf32>
    %c0_35 = arith.constant 0 : index
    %c0_36 = arith.constant 0 : index
    %79 = vector.load %arg7[%c0_35, %c0_36] : memref<2x1xf32, #tpu.memory_space<vmem>>, vector<2x1xf32>
    %80 = vector.extract_strided_slice %78 {offsets = [0, 0], sizes = [2, 1], strides = [1, 1]} : vector<2x10xf32> to vector<2x1xf32>
    %81 = vector.extract_strided_slice %74 {offsets = [0, 0], sizes = [1, 256], strides = [1, 1]} : vector<5x256xf32> to vector<1x256xf32>
    %82 = vector.broadcast %80 : vector<2x1xf32> to vector<2x256xf32>
    %83 = vector.broadcast %81 : vector<1x256xf32> to vector<2x256xf32>
    %84 = arith.mulf %82, %83 : vector<2x256xf32>
    %85 = vector.broadcast %79 : vector<2x1xf32> to vector<2x256xf32>
    %86 = arith.addf %85, %84 : vector<2x256xf32>
    %87 = vector.extract_strided_slice %78 {offsets = [0, 5], sizes = [2, 1], strides = [1, 1]} : vector<2x10xf32> to vector<2x1xf32>
    %88 = vector.extract_strided_slice %77 {offsets = [0, 0], sizes = [1, 256], strides = [1, 1]} : vector<5x256xf32> to vector<1x256xf32>
    %89 = vector.broadcast %87 : vector<2x1xf32> to vector<2x256xf32>
    %90 = vector.broadcast %88 : vector<1x256xf32> to vector<2x256xf32>
    %91 = arith.mulf %89, %90 : vector<2x256xf32>
    %92 = arith.addf %86, %91 : vector<2x256xf32>
    %93 = vector.extract_strided_slice %78 {offsets = [0, 1], sizes = [2, 1], strides = [1, 1]} : vector<2x10xf32> to vector<2x1xf32>
    %94 = vector.extract_strided_slice %74 {offsets = [1, 0], sizes = [1, 256], strides = [1, 1]} : vector<5x256xf32> to vector<1x256xf32>
    %95 = vector.broadcast %93 : vector<2x1xf32> to vector<2x256xf32>
    %96 = vector.broadcast %94 : vector<1x256xf32> to vector<2x256xf32>
    %97 = arith.mulf %95, %96 : vector<2x256xf32>
    %98 = arith.addf %92, %97 : vector<2x256xf32>
    %99 = vector.extract_strided_slice %78 {offsets = [0, 6], sizes = [2, 1], strides = [1, 1]} : vector<2x10xf32> to vector<2x1xf32>
    %100 = vector.extract_strided_slice %77 {offsets = [1, 0], sizes = [1, 256], strides = [1, 1]} : vector<5x256xf32> to vector<1x256xf32>
    %101 = vector.broadcast %99 : vector<2x1xf32> to vector<2x256xf32>
    %102 = vector.broadcast %100 : vector<1x256xf32> to vector<2x256xf32>
    %103 = arith.mulf %101, %102 : vector<2x256xf32>
    %104 = arith.addf %98, %103 : vector<2x256xf32>
    %105 = vector.extract_strided_slice %78 {offsets = [0, 2], sizes = [2, 1], strides = [1, 1]} : vector<2x10xf32> to vector<2x1xf32>
    %106 = vector.extract_strided_slice %74 {offsets = [2, 0], sizes = [1, 256], strides = [1, 1]} : vector<5x256xf32> to vector<1x256xf32>
    %107 = vector.broadcast %105 : vector<2x1xf32> to vector<2x256xf32>
    %108 = vector.broadcast %106 : vector<1x256xf32> to vector<2x256xf32>
    %109 = arith.mulf %107, %108 : vector<2x256xf32>
    %110 = arith.addf %104, %109 : vector<2x256xf32>
    %111 = vector.extract_strided_slice %78 {offsets = [0, 7], sizes = [2, 1], strides = [1, 1]} : vector<2x10xf32> to vector<2x1xf32>
    %112 = vector.extract_strided_slice %77 {offsets = [2, 0], sizes = [1, 256], strides = [1, 1]} : vector<5x256xf32> to vector<1x256xf32>
    %113 = vector.broadcast %111 : vector<2x1xf32> to vector<2x256xf32>
    %114 = vector.broadcast %112 : vector<1x256xf32> to vector<2x256xf32>
    %115 = arith.mulf %113, %114 : vector<2x256xf32>
    %116 = arith.addf %110, %115 : vector<2x256xf32>
    %117 = vector.extract_strided_slice %78 {offsets = [0, 3], sizes = [2, 1], strides = [1, 1]} : vector<2x10xf32> to vector<2x1xf32>
    %118 = vector.extract_strided_slice %74 {offsets = [3, 0], sizes = [1, 256], strides = [1, 1]} : vector<5x256xf32> to vector<1x256xf32>
    %119 = vector.broadcast %117 : vector<2x1xf32> to vector<2x256xf32>
    %120 = vector.broadcast %118 : vector<1x256xf32> to vector<2x256xf32>
    %121 = arith.mulf %119, %120 : vector<2x256xf32>
    %122 = arith.addf %116, %121 : vector<2x256xf32>
    %123 = vector.extract_strided_slice %78 {offsets = [0, 8], sizes = [2, 1], strides = [1, 1]} : vector<2x10xf32> to vector<2x1xf32>
    %124 = vector.extract_strided_slice %77 {offsets = [3, 0], sizes = [1, 256], strides = [1, 1]} : vector<5x256xf32> to vector<1x256xf32>
    %125 = vector.broadcast %123 : vector<2x1xf32> to vector<2x256xf32>
    %126 = vector.broadcast %124 : vector<1x256xf32> to vector<2x256xf32>
    %127 = arith.mulf %125, %126 : vector<2x256xf32>
    %128 = arith.addf %122, %127 : vector<2x256xf32>
    %129 = vector.extract_strided_slice %78 {offsets = [0, 4], sizes = [2, 1], strides = [1, 1]} : vector<2x10xf32> to vector<2x1xf32>
    %130 = vector.extract_strided_slice %74 {offsets = [4, 0], sizes = [1, 256], strides = [1, 1]} : vector<5x256xf32> to vector<1x256xf32>
    %131 = vector.broadcast %129 : vector<2x1xf32> to vector<2x256xf32>
    %132 = vector.broadcast %130 : vector<1x256xf32> to vector<2x256xf32>
    %133 = arith.mulf %131, %132 : vector<2x256xf32>
    %134 = arith.addf %128, %133 : vector<2x256xf32>
    %135 = vector.extract_strided_slice %78 {offsets = [0, 9], sizes = [2, 1], strides = [1, 1]} : vector<2x10xf32> to vector<2x1xf32>
    %136 = vector.extract_strided_slice %77 {offsets = [4, 0], sizes = [1, 256], strides = [1, 1]} : vector<5x256xf32> to vector<1x256xf32>
    %137 = vector.broadcast %135 : vector<2x1xf32> to vector<2x256xf32>
    %138 = vector.broadcast %136 : vector<1x256xf32> to vector<2x256xf32>
    %139 = arith.mulf %137, %138 : vector<2x256xf32>
    %140 = arith.addf %134, %139 : vector<2x256xf32>
    %cst_37 = arith.constant 0.000000e+00 : f32
    %cst_38 = arith.constant 1.000000e+00 : f32
    %141 = vector.broadcast %cst_37 : f32 to vector<2x256xf32>
    %142 = arith.maximumf %141, %140 : vector<2x256xf32>
    %143 = vector.broadcast %cst_38 : f32 to vector<2x256xf32>
    %144 = arith.minimumf %143, %142 : vector<2x256xf32>
    %cst_39 = arith.constant 2.000000e+00 : f32
    %145 = vector.broadcast %cst_39 : f32 to vector<2x256xf32>
    %146 = arith.mulf %144, %145 : vector<2x256xf32>
    %cst_40 = arith.constant 1.000000e+00 : f32
    %147 = vector.broadcast %cst_40 : f32 to vector<2x256xf32>
    %148 = arith.subf %146, %147 : vector<2x256xf32>
    %c0_41 = arith.constant 0 : index
    %c0_42 = arith.constant 0 : index
    %c0_43 = arith.constant 0 : index
    %149 = vector.load %arg8[%c0_41, %c0_42, %c0_43] : memref<1x2x256xf32, #tpu.memory_space<vmem>>, vector<1x2x256xf32>
    %150 = vector.shape_cast %149 : vector<1x2x256xf32> to vector<2x256xf32>
    %151 = vector.shape_cast %148 : vector<2x256xf32> to vector<1x2x256xf32>
    tpu.vector_store %arg8[%c0_41, %c0_42, %c0_43], %151 {strides = array<i32>} : memref<1x2x256xf32, #tpu.memory_space<vmem>>, vector<1x2x256xf32>,
    return
  }
  func.func @transform_0(%arg0: i32) -> (i32, i32, i32, i32) {
    %c0_i32 = arith.constant 0 : i32
    %c0_i32_0 = arith.constant 0 : i32
    %c0_i32_1 = arith.constant 0 : i32
    %c0_i32_2 = arith.constant 0 : i32
    return %arg0, %c0_i32, %c0_i32_0, %c0_i32_1 : i32, i32, i32, i32
  }
  func.func @transform_1(%arg0: i32) -> (i32, i32, i32, i32) {
    %c0_i32 = arith.constant 0 : i32
    %c0_i32_0 = arith.constant 0 : i32
    %c0_i32_1 = arith.constant 0 : i32
    %c0_i32_2 = arith.constant 0 : i32
    return %arg0, %c0_i32, %c0_i32_0, %c0_i32_1 : i32, i32, i32, i32
  }
  func.func @transform_2(%arg0: i32) -> (i32, i32, i32, i32) {
    %c0_i32 = arith.constant 0 : i32
    %c0_i32_0 = arith.constant 0 : i32
    %c0_i32_1 = arith.constant 0 : i32
    %c0_i32_2 = arith.constant 0 : i32
    return %arg0, %c0_i32, %c0_i32_0, %c0_i32_1 : i32, i32, i32, i32
  }
  func.func @transform_3(%arg0: i32) -> (i32, i32) {
    %c0_i32 = arith.constant 0 : i32
    %c0_i32_0 = arith.constant 0 : i32
    %c0_i32_1 = arith.constant 0 : i32
    return %c0_i32, %c0_i32_0 : i32, i32
  }
  func.func @transform_4(%arg0: i32) -> (i32, i32) {
    %c0_i32 = arith.constant 0 : i32
    %c0_i32_0 = arith.constant 0 : i32
    %c0_i32_1 = arith.constant 0 : i32
    return %c0_i32, %c0_i32_0 : i32, i32
  }
  func.func @transform_5(%arg0: i32) -> (i32, i32) {
    %c0_i32 = arith.constant 0 : i32
    %c0_i32_0 = arith.constant 0 : i32
    %c0_i32_1 = arith.constant 0 : i32
    return %c0_i32, %c0_i32_0 : i32, i32
  }
  func.func @transform_6(%arg0: i32) -> (i32, i32) {
    %c0_i32 = arith.constant 0 : i32
    %c0_i32_0 = arith.constant 0 : i32
    %c0_i32_1 = arith.constant 0 : i32
    return %c0_i32, %c0_i32_0 : i32, i32
  }
  func.func @transform_7(%arg0: i32) -> (i32, i32, i32) {
    %c0_i32 = arith.constant 0 : i32
    %c0_i32_0 = arith.constant 0 : i32
    %c0_i32_1 = arith.constant 0 : i32
    return %arg0, %c0_i32, %c0_i32_0 : i32, i32, i32
  }
}

</mosaic_0001>

<llo_original>
// kernel: deepvoxels_forward.1
$region0: #{deepvoxels_forward.1}
  #allocation0 [shape = 'u32[]', space=smem, size = 0x4, offset = 0x4, fixed_abs, tag = 'smem constant byte address 0x4 - core index']
  #allocation1 [shape = 'u32[144,128]{1,0:T(1,128)}', space=vmem, size = 0x12000, scoped, tag = 'internal scratch']
  %s0 = inlined_call_operand.vmem [shape: f32[2,3,16,256], index: 0, kind: input, shape index: {}]
  %s1 = inlined_call_operand.vmem [shape: f32[2,3,16,256], index: 1, kind: input, shape index: {}]
  %s2 = inlined_call_operand.vmem [shape: f32[2,3,16,256], index: 2, kind: input, shape index: {}]
  %s3 = inlined_call_operand.vmem [shape: f32[5,3], index: 3, kind: input, shape index: {}]
  %s4 = inlined_call_operand.vmem [shape: f32[5,1], index: 4, kind: input, shape index: {}]
  %s5 = inlined_call_operand.vmem [shape: f32[2,10], index: 5, kind: input, shape index: {}]
  %s6 = inlined_call_operand.vmem [shape: f32[2,1], index: 6, kind: input, shape index: {}]
  %s7 = inlined_call_operand.vmem [shape: f32[2,2,256], index: 7, kind: output, shape index: {}]
  %s8 = sld [smem:[#allocation0]]
  $region61: #{deepvoxels_forward.1} parent=0
    _
  %s10 = ssub.s32 1, %s8
  %s11 = scalar_select 0, %s10, %s8
  loop: start=0, step=1, limit=4
  $region2: #{deepvoxels_forward.1} parent=0 // loop_pre_header
    _
  $region3: #{deepvoxels_forward.1} parent=0 // loop_header
    %s13 = sphi 0, %s17
    %p14 = scmp.ge.s32.totalorder %s13, 4
    %s23 = sphi 0, %s25
    %s26 = sphi 0, %s23
    %s27 = sphi 0, %s26
    %s43 = sphi 0, %s27
    %s49 = sphi 0, %s51
    %s52 = sphi 0, %s49
    %s53 = sphi 0, %s52
    %s69 = sphi 0, %s53
    %s75 = sphi 0, %s77
    %s78 = sphi 0, %s75
    %s79 = sphi 0, %s78
    %s95 = sphi 0, %s79
    %s99 = sphi 0, %s99
    %s101 = sphi 0, %s99
    %s102 = sphi 0, %s101
    %s116 = sphi 0, %s102
    %s120 = sphi 0, %s120
    %s122 = sphi 0, %s120
    %s123 = sphi 0, %s122
    %s137 = sphi 0, %s123
    %s141 = sphi 0, %s141
    %s143 = sphi 0, %s141
    %s144 = sphi 0, %s143
    %s158 = sphi 0, %s144
    %s162 = sphi 0, %s162
    %s164 = sphi 0, %s162
    %s165 = sphi 0, %s164
    %s179 = sphi 0, %s165
    %s185 = sphi 0, %s187
    %s188 = sphi 0, %s185
    %s189 = sphi 0, %s188
    %s205 = sphi 0, %s189
  $region4: #{deepvoxels_forward.1} parent=0 // loop_header_branch
    %16 = sbr.rel (%p14) target = $region8
  $region5: #{deepvoxels_forward.1} parent=0 // loop_body
    %s18 = ssub.s32 %s13, 1
    %s19 = ssub.s32 %s13, 2
    %s20 = sadd.s32 %s13, 1
    %s21 = ssub.s32 %s13, %s20
    %p22 = scmp.eq.s32.totalorder %s21, 0
    %s24 = sadd.s32 %s23, 1
    %s25 = scalar_select %p22, %s23, %s24
    %p28 = pneg %p22
    %p29 = scmp.eq.s32.totalorder %s13, 1
    %p30 = por %p28, %p29
    %p31 = scmp.ne.s32.totalorder %s23, %s26
    %p32 = scmp.eq.s32.totalorder %s13, 0
    %p33 = por %p31, %p32
    %p34 = scmp.ne.s32.totalorder %s23, %s26
    %p35 = scmp.eq.s32.totalorder %s18, 1
    %p36 = por %p34, %p35
    %p37 = scmp.ne.s32.totalorder %s26, %s27
    %p38 = scmp.eq.s32.totalorder %s18, 0
    %p39 = por %p37, %p38
    %p40 = scmp.ne.s32.totalorder %s26, %s27
    %p41 = scmp.eq.s32.totalorder %s19, 1
    %p42 = por %p40, %p41
    %p44 = scmp.ne.s32.totalorder %s27, %s43
    %p45 = scmp.eq.s32.totalorder %s19, 0
    %p46 = por %p44, %p45
    %s47 = ssub.s32 %s13, %s20
    %p48 = scmp.eq.s32.totalorder %s47, 0
    %s50 = sadd.s32 %s49, 1
    %s51 = scalar_select %p48, %s49, %s50
    %p54 = pneg %p48
    %p55 = scmp.eq.s32.totalorder %s13, 1
    %p56 = por %p54, %p55
    %p57 = scmp.ne.s32.totalorder %s49, %s52
    %p58 = scmp.eq.s32.totalorder %s13, 0
    %p59 = por %p57, %p58
    %p60 = scmp.ne.s32.totalorder %s49, %s52
    %p61 = scmp.eq.s32.totalorder %s18, 1
    %p62 = por %p60, %p61
    %p63 = scmp.ne.s32.totalorder %s52, %s53
    %p64 = scmp.eq.s32.totalorder %s18, 0
    %p65 = por %p63, %p64
    %p66 = scmp.ne.s32.totalorder %s52, %s53
    %p67 = scmp.eq.s32.totalorder %s19, 1
    %p68 = por %p66, %p67
    %p70 = scmp.ne.s32.totalorder %s53, %s69
    %p71 = scmp.eq.s32.totalorder %s19, 0
    %p72 = por %p70, %p71
    %s73 = ssub.s32 %s13, %s20
    %p74 = scmp.eq.s32.totalorder %s73, 0
    %s76 = sadd.s32 %s75, 1
    %s77 = scalar_select %p74, %s75, %s76
    %p80 = pneg %p74
    %p81 = scmp.eq.s32.totalorder %s13, 1
    %p82 = por %p80, %p81
    %p83 = scmp.ne.s32.totalorder %s75, %s78
    %p84 = scmp.eq.s32.totalorder %s13, 0
    %p85 = por %p83, %p84
    %p86 = scmp.ne.s32.totalorder %s75, %s78
    %p87 = scmp.eq.s32.totalorder %s18, 1
    %p88 = por %p86, %p87
    %p89 = scmp.ne.s32.totalorder %s78, %s79
    %p90 = scmp.eq.s32.totalorder %s18, 0
    %p91 = por %p89, %p90
    %p92 = scmp.ne.s32.totalorder %s78, %s79
    %p93 = scmp.eq.s32.totalorder %s19, 1
    %p94 = por %p92, %p93
    %p96 = scmp.ne.s32.totalorder %s79, %s95
    %p97 = scmp.eq.s32.totalorder %s19, 0
    %p98 = por %p96, %p97
    %s100 = sadd.s32 %s99, 1
    %p103 = scmp.eq.s32.totalorder %s13, 1
    %p104 = scmp.ne.s32.totalorder %s99, %s101
    %p105 = scmp.eq.s32.totalorder %s13, 0
    %p106 = por %p104, %p105
    %p107 = scmp.ne.s32.totalorder %s99, %s101
    %p108 = scmp.eq.s32.totalorder %s18, 1
    %p109 = por %p107, %p108
    %p110 = scmp.ne.s32.totalorder %s101, %s102
    %p111 = scmp.eq.s32.totalorder %s18, 0
    %p112 = por %p110, %p111
    %p113 = scmp.ne.s32.totalorder %s101, %s102
    %p114 = scmp.eq.s32.totalorder %s19, 1
    %p115 = por %p113, %p114
    %p117 = scmp.ne.s32.totalorder %s102, %s116
    %p118 = scmp.eq.s32.totalorder %s19, 0
    %p119 = por %p117, %p118
    %s121 = sadd.s32 %s120, 1
    %p124 = scmp.eq.s32.totalorder %s13, 1
    %p125 = scmp.ne.s32.totalorder %s120, %s122
    %p126 = scmp.eq.s32.totalorder %s13, 0
    %p127 = por %p125, %p126
    %p128 = scmp.ne.s32.totalorder %s120, %s122
    %p129 = scmp.eq.s32.totalorder %s18, 1
    %p130 = por %p128, %p129
    %p131 = scmp.ne.s32.totalorder %s122, %s123
    %p132 = scmp.eq.s32.totalorder %s18, 0
    %p133 = por %p131, %p132
    %p134 = scmp.ne.s32.totalorder %s122, %s123
    %p135 = scmp.eq.s32.totalorder %s19, 1
    %p136 = por %p134, %p135
    %p138 = scmp.ne.s32.totalorder %s123, %s137
    %p139 = scmp.eq.s32.totalorder %s19, 0
    %p140 = por %p138, %p139
    %s142 = sadd.s32 %s141, 1
    %p145 = scmp.eq.s32.totalorder %s13, 1
    %p146 = scmp.ne.s32.totalorder %s141, %s143
    %p147 = scmp.eq.s32.totalorder %s13, 0
    %p148 = por %p146, %p147
    %p149 = scmp.ne.s32.totalorder %s141, %s143
    %p150 = scmp.eq.s32.totalorder %s18, 1
    %p151 = por %p149, %p150
    %p152 = scmp.ne.s32.totalorder %s143, %s144
    %p153 = scmp.eq.s32.totalorder %s18, 0
    %p154 = por %p152, %p153
    %p155 = scmp.ne.s32.totalorder %s143, %s144
    %p156 = scmp.eq.s32.totalorder %s19, 1
    %p157 = por %p155, %p156
    %p159 = scmp.ne.s32.totalorder %s144, %s158
    %p160 = scmp.eq.s32.totalorder %s19, 0
    %p161 = por %p159, %p160
    %s163 = sadd.s32 %s162, 1
    %p166 = scmp.eq.s32.totalorder %s13, 1
    %p167 = scmp.ne.s32.totalorder %s162, %s164
    %p168 = scmp.eq.s32.totalorder %s13, 0
    %p169 = por %p167, %p168
    %p170 = scmp.ne.s32.totalorder %s162, %s164
    %p171 = scmp.eq.s32.totalorder %s18, 1
    %p172 = por %p170, %p171
    %p173 = scmp.ne.s32.totalorder %s164, %s165
    %p174 = scmp.eq.s32.totalorder %s18, 0
    %p175 = por %p173, %p174
    %p176 = scmp.ne.s32.totalorder %s164, %s165
    %p177 = scmp.eq.s32.totalorder %s19, 1
    %p178 = por %p176, %p177
    %p180 = scmp.ne.s32.totalorder %s165, %s179
    %p181 = scmp.eq.s32.totalorder %s19, 0
    %p182 = por %p180, %p181
    %s183 = ssub.s32 %s13, %s20
    %p184 = scmp.eq.s32.totalorder %s183, 0
    %s186 = sadd.s32 %s185, 1
    %s187 = scalar_select %p184, %s185, %s186
    %p190 = pneg %p184
    %p191 = scmp.eq.s32.totalorder %s13, 1
    %p192 = por %p190, %p191
    %p193 = scmp.ne.s32.totalorder %s185, %s188
    %p194 = scmp.eq.s32.totalorder %s13, 0
    %p195 = por %p193, %p194
    %p196 = scmp.ne.s32.totalorder %s185, %s188
    %p197 = scmp.eq.s32.totalorder %s18, 1
    %p198 = por %p196, %p197
    %p199 = scmp.ne.s32.totalorder %s188, %s189
    %p200 = scmp.eq.s32.totalorder %s18, 0
    %p201 = por %p199, %p200
    %p202 = scmp.ne.s32.totalorder %s188, %s189
    %p203 = scmp.eq.s32.totalorder %s19, 1
    %p204 = por %p202, %p203
    %p206 = scmp.ne.s32.totalorder %s189, %s205
    %p207 = scmp.eq.s32.totalorder %s19, 0
    %p208 = por %p206, %p207
    %p209 = scmp.le.s32.totalorder 1, %s13
    %p210 = scmp.lt.s32.totalorder %s13, 3
    %p211 = pnand %p209, %p210
    %p212 = pneg %p211
    // Predicated region
    $region9: #{deepvoxels_forward.1} parent=5 // pred_check
      _
    $region10: #{deepvoxels_forward.1} parent=5 // pred_check_branch
      %214 = sbr.rel (%p211) target = $region12
    $region11: #{deepvoxels_forward.1} parent=5 // pred_region
      %s215 = ssub.s32 %s13, 1
      // Predicated region
      $region13: #{deepvoxels_forward.1} parent=11 // pred_check
        %p216 = pneg %p112
      $region14: #{deepvoxels_forward.1} parent=11 // pred_check_branch
        %218 = sbr.rel (%p216) target = $region16
      $region15: #{deepvoxels_forward.1} parent=11 // pred_region
        _
      $region16: #{deepvoxels_forward.1} parent=11 // pred_fallthru
        _
      // Predicated region
      $region17: #{deepvoxels_forward.1} parent=11 // pred_check
        %p219 = pneg %p133
      $region18: #{deepvoxels_forward.1} parent=11 // pred_check_branch
        %221 = sbr.rel (%p219) target = $region20
      $region19: #{deepvoxels_forward.1} parent=11 // pred_region
        _
      $region20: #{deepvoxels_forward.1} parent=11 // pred_fallthru
        _
      // Predicated region
      $region21: #{deepvoxels_forward.1} parent=11 // pred_check
        %p222 = pneg %p154
      $region22: #{deepvoxels_forward.1} parent=11 // pred_check_branch
        %224 = sbr.rel (%p222) target = $region24
      $region23: #{deepvoxels_forward.1} parent=11 // pred_region
        _
      $region24: #{deepvoxels_forward.1} parent=11 // pred_fallthru
        _
      // Predicated region
      $region25: #{deepvoxels_forward.1} parent=11 // pred_check
        %p225 = pneg %p175
      $region26: #{deepvoxels_forward.1} parent=11 // pred_check_branch
        %227 = sbr.rel (%p225) target = $region28
      $region27: #{deepvoxels_forward.1} parent=11 // pred_region
        _
      $region28: #{deepvoxels_forward.1} parent=11 // pred_fallthru
        _
    $region12: #{deepvoxels_forward.1} parent=5 // pred_fallthru
      _
    %p228 = scmp.lt.s32.totalorder %s13, 2
    // Predicated region
    $region29: #{deepvoxels_forward.1} parent=5 // pred_check
      %p229 = pneg %p228
    $region30: #{deepvoxels_forward.1} parent=5 // pred_check_branch
      %231 = sbr.rel (%p229) target = $region32
    $region31: #{deepvoxels_forward.1} parent=5 // pred_region
      // Predicated region
      $region33: #{deepvoxels_forward.1} parent=31 // pred_check
        %p232 = pneg %p33
      $region34: #{deepvoxels_forward.1} parent=31 // pred_check_branch
        %234 = sbr.rel (%p232) target = $region36
      $region35: #{deepvoxels_forward.1} parent=31 // pred_region
        %p235 = scmp.lt.s32.totalorder %s13, 1
        %s236 = scalar_select %p235, %s13, 1
        %s237 = smul.addr %s236, 12
        %s238 = smul.addr %s237, 8
        %s239 = scalar_lea.vmem %s0, %s238
      $region36: #{deepvoxels_forward.1} parent=31 // pred_fallthru
        _
      // Predicated region
      $region37: #{deepvoxels_forward.1} parent=31 // pred_check
        %p240 = pneg %p59
      $region38: #{deepvoxels_forward.1} parent=31 // pred_check_branch
        %242 = sbr.rel (%p240) target = $region40
      $region39: #{deepvoxels_forward.1} parent=31 // pred_region
        %p243 = scmp.lt.s32.totalorder %s13, 1
        %s244 = scalar_select %p243, %s13, 1
        %s245 = smul.addr %s244, 12
        %s246 = smul.addr %s245, 8
        %s247 = scalar_lea.vmem %s1, %s246
      $region40: #{deepvoxels_forward.1} parent=31 // pred_fallthru
        _
      // Predicated region
      $region41: #{deepvoxels_forward.1} parent=31 // pred_check
        %p248 = pneg %p85
      $region42: #{deepvoxels_forward.1} parent=31 // pred_check_branch
        %250 = sbr.rel (%p248) target = $region44
      $region43: #{deepvoxels_forward.1} parent=31 // pred_region
        %p251 = scmp.lt.s32.totalorder %s13, 1
        %s252 = scalar_select %p251, %s13, 1
        %s253 = smul.addr %s252, 12
        %s254 = smul.addr %s253, 8
        %s255 = scalar_lea.vmem %s2, %s254
      $region44: #{deepvoxels_forward.1} parent=31 // pred_fallthru
        _
    $region32: #{deepvoxels_forward.1} parent=5 // pred_fallthru
      _
    %p256 = scmp.le.s32.totalorder 1, %s13
    %p257 = scmp.lt.s32.totalorder %s13, 3
    %p258 = pnand %p256, %p257
    %p259 = pneg %p258
    // Predicated region
    $region45: #{deepvoxels_forward.1} parent=5 // pred_check
      _
    $region46: #{deepvoxels_forward.1} parent=5 // pred_check_branch
      %261 = sbr.rel (%p258) target = $region48
    $region47: #{deepvoxels_forward.1} parent=5 // pred_region
      %s262 = ssub.s32 %s13, 1
      %p263 = scmp.lt.s32.totalorder %s18, 1
      %s264 = scalar_select %p263, %s18, 1
      %s265 = smul.addr %s264, 12
      %s266 = smul.addr %s265, 8
      %s267 = scalar_lea.vmem %s0, %s266
      %p268 = pneg %p39
      %p269 = pneg %p36
      %p270 = scmp.lt.s32.totalorder %s18, 1
      %s271 = scalar_select %p270, %s18, 1
      %s272 = smul.addr %s271, 12
      %s273 = smul.addr %s272, 8
      %s274 = scalar_lea.vmem %s1, %s273
      %p275 = pneg %p65
      %p276 = pneg %p62
      %p277 = scmp.lt.s32.totalorder %s18, 1
      %s278 = scalar_select %p277, %s18, 1
      %s279 = smul.addr %s278, 12
      %s280 = smul.addr %s279, 8
      %s281 = scalar_lea.vmem %s2, %s280
      %p282 = pneg %p91
      %p283 = pneg %p88
      %p284 = pneg %p112
      %p285 = pneg %p109
      %p286 = pneg %p133
      %p287 = pneg %p130
      %p288 = pneg %p154
      %p289 = pneg %p151
      %p290 = pneg %p175
      %p291 = pneg %p172
      %p292 = pneg %p201
      %p293 = pneg %p198
      %p294 = scmp.lt.s32.totalorder %s18, 1
      %s295 = scalar_select %p294, %s18, 1
      %s296 = smul.addr %s295, 2
      %s297 = smul.addr %s296, 2
      %s298 = scalar_lea.vmem %s7, %s297
      %p299 = scmp.lt.s32.totalorder %s18, 1
      %s300 = scalar_select %p299, %s18, 1
      %s301 = smul.addr %s300, 12
      %s302 = smul.addr %s301, 8
      %s303 = scalar_lea.vmem %s0, %s302
      %p304 = scmp.lt.s32.totalorder %s18, 1
      %s305 = scalar_select %p304, %s18, 1
      %s306 = smul.addr %s305, 12
      %s307 = smul.addr %s306, 8
      %s308 = scalar_lea.vmem %s1, %s307
      %p309 = scmp.lt.s32.totalorder %s18, 1
      %s310 = scalar_select %p309, %s18, 1
      %s311 = smul.addr %s310, 12
      %s312 = smul.addr %s311, 8
      %s313 = scalar_lea.vmem %s2, %s312
      %p314 = scmp.lt.s32.totalorder %s18, 1
      %s315 = scalar_select %p314, %s18, 1
      %s316 = smul.addr %s315, 2
      %s317 = smul.addr %s316, 2
      %s318 = scalar_lea.vmem %s7, %s317
      %v319 = vld [vmem:[%s303] sm:$0xff]
      %v320 = vld [vmem:[%s303 + $0x8] sm:$0xff]
      %v321 = vld [vmem:[%s303 + $0x10] sm:$0xff]
      %v322 = vld [vmem:[%s303 + $0x18] sm:$0xff]
      %v323 = vld [vmem:[%s303 + $0x20] sm:$0xff]
      %v324 = vld [vmem:[%s303 + $0x28] sm:$0xff]
      %v325 = vld [vmem:[%s303 + $0x30] sm:$0xff]
      %v326 = vld [vmem:[%s303 + $0x38] sm:$0xff]
      %v327 = vld [vmem:[%s303 + $0x40] sm:$0xff]
      %v328 = vld [vmem:[%s303 + $0x48] sm:$0xff]
      %v329 = vld [vmem:[%s303 + $0x50] sm:$0xff]
      %v330 = vld [vmem:[%s303 + $0x58] sm:$0xff]
      %v331 = vld [vmem:[%s308] sm:$0xff]
      %v332 = vld [vmem:[%s308 + $0x8] sm:$0xff]
      %v333 = vld [vmem:[%s308 + $0x10] sm:$0xff]
      %v334 = vld [vmem:[%s308 + $0x18] sm:$0xff]
      %v335 = vld [vmem:[%s308 + $0x20] sm:$0xff]
      %v336 = vld [vmem:[%s308 + $0x28] sm:$0xff]
      %v337 = vld [vmem:[%s308 + $0x30] sm:$0xff]
      %v338 = vld [vmem:[%s308 + $0x38] sm:$0xff]
      %v339 = vld [vmem:[%s308 + $0x40] sm:$0xff]
      %v340 = vld [vmem:[%s308 + $0x48] sm:$0xff]
      %v341 = vld [vmem:[%s308 + $0x50] sm:$0xff]
      %v342 = vld [vmem:[%s308 + $0x58] sm:$0xff]
      %v343 = vld [vmem:[%s313] sm:$0xff]
      %v344 = vld [vmem:[%s313 + $0x8] sm:$0xff]
      %v345 = vld [vmem:[%s313 + $0x10] sm:$0xff]
      %v346 = vld [vmem:[%s313 + $0x18] sm:$0xff]
      %v347 = vld [vmem:[%s313 + $0x20] sm:$0xff]
      %v348 = vld [vmem:[%s313 + $0x28] sm:$0xff]
      %v349 = vld [vmem:[%s313 + $0x30] sm:$0xff]
      %v350 = vld [vmem:[%s313 + $0x38] sm:$0xff]
      %v351 = vld [vmem:[%s313 + $0x40] sm:$0xff]
      %v352 = vld [vmem:[%s313 + $0x48] sm:$0xff]
      %v353 = vld [vmem:[%s313 + $0x50] sm:$0xff]
      %v354 = vld [vmem:[%s313 + $0x58] sm:$0xff]
      %v355 = vmul.f32 %v331, 0.03
      %v356 = vmul.f32 %v332, 0.03
      %v357 = vmul.f32 %v333, 0.03
      %v358 = vmul.f32 %v334, 0.03
      %v359 = vmul.f32 %v335, 0.03
      %v360 = vmul.f32 %v336, 0.03
      %v361 = vmul.f32 %v337, 0.03
      %v362 = vmul.f32 %v338, 0.03
      %v363 = vmul.f32 %v339, 0.03
      %v364 = vmul.f32 %v340, 0.03
      %v365 = vmul.f32 %v341, 0.03
      %v366 = vmul.f32 %v342, 0.03
      %v367 = vadd.f32 %v355, 0.05
      %v368 = vadd.f32 %v356, 0.05
      %v369 = vadd.f32 %v357, 0.05
      %v370 = vadd.f32 %v358, 0.05
      %v371 = vadd.f32 %v359, 0.05
      %v372 = vadd.f32 %v360, 0.05
      %v373 = vadd.f32 %v361, 0.05
      %v374 = vadd.f32 %v362, 0.05
      %v375 = vadd.f32 %v363, 0.05
      %v376 = vadd.f32 %v364, 0.05
      %v377 = vadd.f32 %v365, 0.05
      %v378 = vadd.f32 %v366, 0.05
      %v379 = vadd.f32 %v367, %v319
      %v380 = vadd.f32 %v368, %v320
      %v381 = vadd.f32 %v369, %v321
      %v382 = vadd.f32 %v370, %v322
      %v383 = vadd.f32 %v371, %v323
      %v384 = vadd.f32 %v372, %v324
      %v385 = vadd.f32 %v373, %v325
      %v386 = vadd.f32 %v374, %v326
      %v387 = vadd.f32 %v375, %v327
      %v388 = vadd.f32 %v376, %v328
      %v389 = vadd.f32 %v377, %v329
      %v390 = vadd.f32 %v378, %v330
      %v391 = vmul.f32 %v343, 0.03
      %v392 = vmul.f32 %v344, 0.03
      %v393 = vmul.f32 %v345, 0.03
      %v394 = vmul.f32 %v346, 0.03
      %v395 = vmul.f32 %v347, 0.03
      %v396 = vmul.f32 %v348, 0.03
      %v397 = vmul.f32 %v349, 0.03
      %v398 = vmul.f32 %v350, 0.03
      %v399 = vmul.f32 %v351, 0.03
      %v400 = vmul.f32 %v352, 0.03
      %v401 = vmul.f32 %v353, 0.03
      %v402 = vmul.f32 %v354, 0.03
      %v403 = vmul.f32 %v391, %v379
      %v404 = vmul.f32 %v392, %v380
      %v405 = vmul.f32 %v393, %v381
      %v406 = vmul.f32 %v394, %v382
      %v407 = vmul.f32 %v395, %v383
      %v408 = vmul.f32 %v396, %v384
      %v409 = vmul.f32 %v397, %v385
      %v410 = vmul.f32 %v398, %v386
      %v411 = vmul.f32 %v399, %v387
      %v412 = vmul.f32 %v400, %v388
      %v413 = vmul.f32 %v401, %v389
      %v414 = vmul.f32 %v402, %v390
      %v415 = vadd.f32 %v403, %v379
      %v416 = vadd.f32 %v404, %v380
      %v417 = vadd.f32 %v405, %v381
      %v418 = vadd.f32 %v406, %v382
      %v419 = vadd.f32 %v407, %v383
      %v420 = vadd.f32 %v408, %v384
      %v421 = vadd.f32 %v409, %v385
      %v422 = vadd.f32 %v410, %v386
      %v423 = vadd.f32 %v411, %v387
      %v424 = vadd.f32 %v412, %v388
      %v425 = vadd.f32 %v413, %v389
      %v426 = vadd.f32 %v414, %v390
      %v427 = vmin.f32 %v415, %v416
      %428 = vmin.xlane.f32.xlu0 %v427
      %v429 = vpop.xlane.xlu0 %428
      %v430 = vmin.f32 %v417, %v418
      %431 = vmin.xlane.f32.xlu0 %v430
      %v432 = vpop.xlane.xlu0 %431
      %v433 = vmin.f32 %v419, %v420
      %434 = vmin.xlane.f32.xlu0 %v433
      %v435 = vpop.xlane.xlu0 %434
      %v436 = vmin.f32 %v421, %v422
      %437 = vmin.xlane.f32.xlu0 %v436
      %v438 = vpop.xlane.xlu0 %437
      %v439 = vmin.f32 %v423, %v424
      %440 = vmin.xlane.f32.xlu0 %v439
      %v441 = vpop.xlane.xlu0 %440
      %v442 = vmin.f32 %v425, %v426
      %443 = vmin.xlane.f32.xlu0 %v442
      %v444 = vpop.xlane.xlu0 %443
      %v445 = vmin.f32 %v429, %v432
      %v446 = vrot.slane %v445, 4
      %v447 = vmin.f32 %v445, %v446
      %v448 = vrot.slane %v447, 2
      %v449 = vmin.f32 %v447, %v448
      %v450 = vrot.slane %v449, 1
      %v451 = vmin.f32 %v449, %v450
      %v452 = vmin.f32 %v435, %v438
      %v453 = vrot.slane %v452, 4
      %v454 = vmin.f32 %v452, %v453
      %v455 = vrot.slane %v454, 2
      %v456 = vmin.f32 %v454, %v455
      %v457 = vrot.slane %v456, 1
      %v458 = vmin.f32 %v456, %v457
      %v459 = vmin.f32 %v441, %v444
      %v460 = vrot.slane %v459, 4
      %v461 = vmin.f32 %v459, %v460
      %v462 = vrot.slane %v461, 2
      %v463 = vmin.f32 %v461, %v462
      %v464 = vrot.slane %v463, 1
      %v465 = vmin.f32 %v463, %v464
      %v466 = vsub.f32 %v415, %v451
      %v467 = vsub.f32 %v416, %v451
      %v468 = vsub.f32 %v417, %v451
      %v469 = vsub.f32 %v418, %v451
      %v470 = vsub.f32 %v419, %v458
      %v471 = vsub.f32 %v420, %v458
      %v472 = vsub.f32 %v421, %v458
      %v473 = vsub.f32 %v422, %v458
      %v474 = vsub.f32 %v423, %v465
      %v475 = vsub.f32 %v424, %v465
      %v476 = vsub.f32 %v425, %v465
      %v477 = vsub.f32 %v426, %v465
      %v478 = vmax.f32 %v466, %v467
      %479 = vmax.xlane.f32.xlu0 %v478
      %v480 = vpop.xlane.xlu0 %479
      %v481 = vmax.f32 %v468, %v469
      %482 = vmax.xlane.f32.xlu0 %v481
      %v483 = vpop.xlane.xlu0 %482
      %v484 = vmax.f32 %v470, %v471
      %485 = vmax.xlane.f32.xlu0 %v484
      %v486 = vpop.xlane.xlu0 %485
      %v487 = vmax.f32 %v472, %v473
      %488 = vmax.xlane.f32.xlu0 %v487
      %v489 = vpop.xlane.xlu0 %488
      %v490 = vmax.f32 %v474, %v475
      %491 = vmax.xlane.f32.xlu0 %v490
      %v492 = vpop.xlane.xlu0 %491
      %v493 = vmax.f32 %v476, %v477
      %494 = vmax.xlane.f32.xlu0 %v493
      %v495 = vpop.xlane.xlu0 %494
      %v496 = vmax.f32 %v480, %v483
      %v497 = vrot.slane %v496, 4
      %v498 = vmax.f32 %v496, %v497
      %v499 = vrot.slane %v498, 2
      %v500 = vmax.f32 %v498, %v499
      %v501 = vrot.slane %v500, 1
      %v502 = vmax.f32 %v500, %v501
      %v503 = vmax.f32 %v486, %v489
      %v504 = vrot.slane %v503, 4
      %v505 = vmax.f32 %v503, %v504
      %v506 = vrot.slane %v505, 2
      %v507 = vmax.f32 %v505, %v506
      %v508 = vrot.slane %v507, 1
      %v509 = vmax.f32 %v507, %v508
      %v510 = vmax.f32 %v492, %v495
      %v511 = vrot.slane %v510, 4
      %v512 = vmax.f32 %v510, %v511
      %v513 = vrot.slane %v512, 2
      %v514 = vmax.f32 %v512, %v513
      %v515 = vrot.slane %v514, 1
      %v516 = vmax.f32 %v514, %v515
      %v517 = vadd.f32 %v502, 1e-15
      %v518 = vadd.f32 %v509, 1e-15
      %v519 = vadd.f32 %v516, 1e-15
      %v520 = vrcp.pop %v517
      %v521 = vmul.f32 1.0, %v520
      %v522 = vrcp.pop %v518
      %v523 = vmul.f32 1.0, %v522
      %v524 = vrcp.pop %v519
      %v525 = vmul.f32 1.0, %v524
      %v526 = vmul.f32 %v466, %v521
      %v527 = vmul.f32 %v467, %v521
      %v528 = vmul.f32 %v468, %v521
      %v529 = vmul.f32 %v469, %v521
      %v530 = vmul.f32 %v470, %v523
      %v531 = vmul.f32 %v471, %v523
      %v532 = vmul.f32 %v472, %v523
      %v533 = vmul.f32 %v473, %v523
      %v534 = vmul.f32 %v474, %v525
      %v535 = vmul.f32 %v475, %v525
      %v536 = vmul.f32 %v476, %v525
      %v537 = vmul.f32 %v477, %v525
      %v538 = vld [vmem:[%s3] sm:$0x1f]
      %v539 = vld [vmem:[%s4] sm:$0x1f]
      %v541 = vcombine.high %v539, %v539
      %v543 = vunpack.c.l.s4 1966171168
      %v544 = vunpack.c.0.s8 %v543
      %v545 = vlaneseq
      %v546 = vshrl.u32 %v545, 7
      %v547 = vsub.s32 %v544, %v546
      %v548 = vrot.slane %v539, %v547
      %v550 = vunpack.c.l.s4 1966171168
      %v551 = vunpack.c.0.s8 %v550
      %v552 = vlaneseq
      %v553 = vshrl.u32 %v552, 7
      %v554 = vsub.s32 %v551, %v553
      %v555 = vrot.slane %v541, %v554
      %v556 = vcombine.high %v548, %v548
      %v558 = vunpack.c.l.s4 1966171168
      %v559 = vunpack.c.0.s8 %v558
      %v560 = vlaneseq
      %v561 = vshrl.u32 %v560, 7
      %v562 = vsub.s32 %v559, %v561
      %v563 = vrot.slane %v548, %v562
      %v565 = vunpack.c.l.s4 1966171168
      %v566 = vunpack.c.0.s8 %v565
      %v567 = vlaneseq
      %v568 = vshrl.u32 %v567, 7
      %v569 = vsub.s32 %v566, %v568
      %v570 = vrot.slane %v555, %v569
      %v572 = vunpack.c.l.s4 1966171168
      %v573 = vunpack.c.0.s8 %v572
      %v574 = vlaneseq
      %v575 = vshrl.u32 %v574, 7
      %v576 = vsub.s32 %v573, %v575
      %v577 = vrot.slane %v556, %v576
      %v578 = vcombine.high %v563, %v563
      %v579 = vcombine.high %v577, %v577
      %v581 = vcombine.high %v538, %v538
      %v583 = vunpack.c.l.s4 1966171168
      %v584 = vunpack.c.0.s8 %v583
      %v585 = vlaneseq
      %v586 = vshrl.u32 %v585, 7
      %v587 = vsub.s32 %v584, %v586
      %v588 = vrot.slane %v538, %v587
      %v590 = vunpack.c.l.s4 1966171168
      %v591 = vunpack.c.0.s8 %v590
      %v592 = vlaneseq
      %v593 = vshrl.u32 %v592, 7
      %v594 = vsub.s32 %v591, %v593
      %v595 = vrot.slane %v581, %v594
      %v596 = vcombine.high %v588, %v588
      %v598 = vunpack.c.l.s4 1966171168
      %v599 = vunpack.c.0.s8 %v598
      %v600 = vlaneseq
      %v601 = vshrl.u32 %v600, 7
      %v602 = vsub.s32 %v599, %v601
      %v603 = vrot.slane %v588, %v602
      %v605 = vunpack.c.l.s4 1966171168
      %v606 = vunpack.c.0.s8 %v605
      %v607 = vlaneseq
      %v608 = vshrl.u32 %v607, 7
      %v609 = vsub.s32 %v606, %v608
      %v610 = vrot.slane %v595, %v609
      %v612 = vunpack.c.l.s4 1966171168
      %v613 = vunpack.c.0.s8 %v612
      %v614 = vlaneseq
      %v615 = vshrl.u32 %v614, 7
      %v616 = vsub.s32 %v613, %v615
      %v617 = vrot.slane %v596, %v616
      %v618 = vcombine.high %v603, %v603
      %v619 = vcombine.high %v617, %v617
      %v620 = vlaneseq
      %v621 = vshrl.u32 %v620, 7
      %v622 = vsub.s32 0, %v621
      %v623 = vrot.slane %v603, %v622
      %v624 = vlaneseq
      %v625 = vshrl.u32 %v624, 7
      %v626 = vsub.s32 0, %v625
      %v627 = vrot.slane %v617, %v626
      %v628 = vlaneseq
      %v629 = vshrl.u32 %v628, 7
      %v630 = vsub.s32 0, %v629
      %v631 = vrot.slane %v618, %v630
      %v632 = vlaneseq
      %v633 = vshrl.u32 %v632, 7
      %v634 = vsub.s32 0, %v633
      %v635 = vrot.slane %v619, %v634
      %v636 = vlaneseq
      %v637 = vshrl.u32 %v636, 7
      %v638 = vsub.s32 0, %v637
      %v639 = vrot.slane %v610, %v638
      %640 = vset.pattern.permute.xlu0 0
      %641 = vperm.xlu0 %640, %v623
      %v642 = vpop.permute.xlu0 %641
      %644 = vset.pattern.permute.xlu0 0
      %645 = vperm.xlu0 %644, %v627
      %v646 = vpop.permute.xlu0 %645
      %648 = vset.pattern.permute.xlu0 0
      %649 = vperm.xlu0 %648, %v631
      %v650 = vpop.permute.xlu0 %649
      %652 = vset.pattern.permute.xlu0 0
      %653 = vperm.xlu0 %652, %v635
      %v654 = vpop.permute.xlu0 %653
      %656 = vset.pattern.permute.xlu0 0
      %657 = vperm.xlu0 %656, %v639
      %v658 = vpop.permute.xlu0 %657
      %v660 = vmul.f32 %v642, %v526
      %v661 = vmul.f32 %v642, %v527
      %v662 = vmul.f32 %v642, %v528
      %v663 = vmul.f32 %v642, %v529
      %v664 = vmul.f32 %v646, %v526
      %v665 = vmul.f32 %v646, %v527
      %v666 = vmul.f32 %v646, %v528
      %v667 = vmul.f32 %v646, %v529
      %v668 = vmul.f32 %v650, %v526
      %v669 = vmul.f32 %v650, %v527
      %v670 = vmul.f32 %v650, %v528
      %v671 = vmul.f32 %v650, %v529
      %v672 = vmul.f32 %v654, %v526
      %v673 = vmul.f32 %v654, %v527
      %v674 = vmul.f32 %v654, %v528
      %v675 = vmul.f32 %v654, %v529
      %v676 = vmul.f32 %v658, %v526
      %v677 = vmul.f32 %v658, %v527
      %v678 = vmul.f32 %v658, %v528
      %v679 = vmul.f32 %v658, %v529
      %v680 = vlaneseq
      %v681 = vshrl.u32 %v680, 7
      %v682 = vsub.s32 0, %v681
      %v683 = vrot.slane %v563, %v682
      %v684 = vlaneseq
      %v685 = vshrl.u32 %v684, 7
      %v686 = vsub.s32 0, %v685
      %v687 = vrot.slane %v577, %v686
      %v688 = vlaneseq
      %v689 = vshrl.u32 %v688, 7
      %v690 = vsub.s32 0, %v689
      %v691 = vrot.slane %v578, %v690
      %v692 = vlaneseq
      %v693 = vshrl.u32 %v692, 7
      %v694 = vsub.s32 0, %v693
      %v695 = vrot.slane %v579, %v694
      %v696 = vlaneseq
      %v697 = vshrl.u32 %v696, 7
      %v698 = vsub.s32 0, %v697
      %v699 = vrot.slane %v570, %v698
      %700 = vset.pattern.permute.xlu0 0
      %701 = vperm.xlu0 %700, %v683
      %v702 = vpop.permute.xlu0 %701
      %704 = vset.pattern.permute.xlu0 0
      %705 = vperm.xlu0 %704, %v687
      %v706 = vpop.permute.xlu0 %705
      %708 = vset.pattern.permute.xlu0 0
      %709 = vperm.xlu0 %708, %v691
      %v710 = vpop.permute.xlu0 %709
      %712 = vset.pattern.permute.xlu0 0
      %713 = vperm.xlu0 %712, %v695
      %v714 = vpop.permute.xlu0 %713
      %716 = vset.pattern.permute.xlu0 0
      %717 = vperm.xlu0 %716, %v699
      %v718 = vpop.permute.xlu0 %717
      %v720 = vadd.f32 %v702, %v660
      %v721 = vadd.f32 %v702, %v661
      %v722 = vadd.f32 %v702, %v662
      %v723 = vadd.f32 %v702, %v663
      %v724 = vadd.f32 %v706, %v664
      %v725 = vadd.f32 %v706, %v665
      %v726 = vadd.f32 %v706, %v666
      %v727 = vadd.f32 %v706, %v667
      %v728 = vadd.f32 %v710, %v668
      %v729 = vadd.f32 %v710, %v669
      %v730 = vadd.f32 %v710, %v670
      %v731 = vadd.f32 %v710, %v671
      %v732 = vadd.f32 %v714, %v672
      %v733 = vadd.f32 %v714, %v673
      %v734 = vadd.f32 %v714, %v674
      %v735 = vadd.f32 %v714, %v675
      %v736 = vadd.f32 %v718, %v676
      %v737 = vadd.f32 %v718, %v677
      %v738 = vadd.f32 %v718, %v678
      %v739 = vadd.f32 %v718, %v679
      %740 = vset.pattern.permute.xlu0 1
      %741 = vperm.xlu0 %740, %v623
      %v742 = vpop.permute.xlu0 %741
      %744 = vset.pattern.permute.xlu0 1
      %745 = vperm.xlu0 %744, %v627
      %v746 = vpop.permute.xlu0 %745
      %748 = vset.pattern.permute.xlu0 1
      %749 = vperm.xlu0 %748, %v631
      %v750 = vpop.permute.xlu0 %749
      %752 = vset.pattern.permute.xlu0 1
      %753 = vperm.xlu0 %752, %v635
      %v754 = vpop.permute.xlu0 %753
      %756 = vset.pattern.permute.xlu0 1
      %757 = vperm.xlu0 %756, %v639
      %v758 = vpop.permute.xlu0 %757
      %v760 = vmul.f32 %v742, %v530
      %v761 = vmul.f32 %v742, %v531
      %v762 = vmul.f32 %v742, %v532
      %v763 = vmul.f32 %v742, %v533
      %v764 = vmul.f32 %v746, %v530
      %v765 = vmul.f32 %v746, %v531
      %v766 = vmul.f32 %v746, %v532
      %v767 = vmul.f32 %v746, %v533
      %v768 = vmul.f32 %v750, %v530
      %v769 = vmul.f32 %v750, %v531
      %v770 = vmul.f32 %v750, %v532
      %v771 = vmul.f32 %v750, %v533
      %v772 = vmul.f32 %v754, %v530
      %v773 = vmul.f32 %v754, %v531
      %v774 = vmul.f32 %v754, %v532
      %v775 = vmul.f32 %v754, %v533
      %v776 = vmul.f32 %v758, %v530
      %v777 = vmul.f32 %v758, %v531
      %v778 = vmul.f32 %v758, %v532
      %v779 = vmul.f32 %v758, %v533
      %v780 = vadd.f32 %v720, %v760
      %v781 = vadd.f32 %v721, %v761
      %v782 = vadd.f32 %v722, %v762
      %v783 = vadd.f32 %v723, %v763
      %v784 = vadd.f32 %v724, %v764
      %v785 = vadd.f32 %v725, %v765
      %v786 = vadd.f32 %v726, %v766
      %v787 = vadd.f32 %v727, %v767
      %v788 = vadd.f32 %v728, %v768
      %v789 = vadd.f32 %v729, %v769
      %v790 = vadd.f32 %v730, %v770
      %v791 = vadd.f32 %v731, %v771
      %v792 = vadd.f32 %v732, %v772
      %v793 = vadd.f32 %v733, %v773
      %v794 = vadd.f32 %v734, %v774
      %v795 = vadd.f32 %v735, %v775
      %v796 = vadd.f32 %v736, %v776
      %v797 = vadd.f32 %v737, %v777
      %v798 = vadd.f32 %v738, %v778
      %v799 = vadd.f32 %v739, %v779
      %800 = vset.pattern.permute.xlu0 2
      %801 = vperm.xlu0 %800, %v623
      %v802 = vpop.permute.xlu0 %801
      %804 = vset.pattern.permute.xlu0 2
      %805 = vperm.xlu0 %804, %v627
      %v806 = vpop.permute.xlu0 %805
      %808 = vset.pattern.permute.xlu0 2
      %809 = vperm.xlu0 %808, %v631
      %v810 = vpop.permute.xlu0 %809
      %812 = vset.pattern.permute.xlu0 2
      %813 = vperm.xlu0 %812, %v635
      %v814 = vpop.permute.xlu0 %813
      %816 = vset.pattern.permute.xlu0 2
      %817 = vperm.xlu0 %816, %v639
      %v818 = vpop.permute.xlu0 %817
      %v820 = vmul.f32 %v802, %v534
      %v821 = vmul.f32 %v802, %v535
      %v822 = vmul.f32 %v802, %v536
      %v823 = vmul.f32 %v802, %v537
      %v824 = vmul.f32 %v806, %v534
      %v825 = vmul.f32 %v806, %v535
      %v826 = vmul.f32 %v806, %v536
      %v827 = vmul.f32 %v806, %v537
      %v828 = vmul.f32 %v810, %v534
      %v829 = vmul.f32 %v810, %v535
      %v830 = vmul.f32 %v810, %v536
      %v831 = vmul.f32 %v810, %v537
      %v832 = vmul.f32 %v814, %v534
      %v833 = vmul.f32 %v814, %v535
      %v834 = vmul.f32 %v814, %v536
      %v835 = vmul.f32 %v814, %v537
      %v836 = vmul.f32 %v818, %v534
      %v837 = vmul.f32 %v818, %v535
      %v838 = vmul.f32 %v818, %v536
      %v839 = vmul.f32 %v818, %v537
      %v840 = vadd.f32 %v780, %v820
      %v841 = vadd.f32 %v781, %v821
      %v842 = vadd.f32 %v782, %v822
      %v843 = vadd.f32 %v783, %v823
      %v844 = vadd.f32 %v784, %v824
      %v845 = vadd.f32 %v785, %v825
      %v846 = vadd.f32 %v786, %v826
      %v847 = vadd.f32 %v787, %v827
      %v848 = vadd.f32 %v788, %v828
      %v849 = vadd.f32 %v789, %v829
      %v850 = vadd.f32 %v790, %v830
      %v851 = vadd.f32 %v791, %v831
      %v852 = vadd.f32 %v792, %v832
      %v853 = vadd.f32 %v793, %v833
      %v854 = vadd.f32 %v794, %v834
      %v855 = vadd.f32 %v795, %v835
      %v856 = vadd.f32 %v796, %v836
      %v857 = vadd.f32 %v797, %v837
      %v858 = vadd.f32 %v798, %v838
      %v859 = vadd.f32 %v799, %v839
      %v860 = vmax.f32 %v840, 0.0
      %v861 = vmax.f32 %v841, 0.0
      %v862 = vmax.f32 %v842, 0.0
      %v863 = vmax.f32 %v843, 0.0
      %v864 = vmax.f32 %v844, 0.0
      %v865 = vmax.f32 %v845, 0.0
      %v866 = vmax.f32 %v846, 0.0
      %v867 = vmax.f32 %v847, 0.0
      %v868 = vmax.f32 %v848, 0.0
      %v869 = vmax.f32 %v849, 0.0
      %v870 = vmax.f32 %v850, 0.0
      %v871 = vmax.f32 %v851, 0.0
      %v872 = vmax.f32 %v852, 0.0
      %v873 = vmax.f32 %v853, 0.0
      %v874 = vmax.f32 %v854, 0.0
      %v875 = vmax.f32 %v855, 0.0
      %v876 = vmax.f32 %v856, 0.0
      %v877 = vmax.f32 %v857, 0.0
      %v878 = vmax.f32 %v858, 0.0
      %v879 = vmax.f32 %v859, 0.0
      %v880 = vmin.f32 %v860, %v861
      %881 = vmin.xlane.f32.xlu0 %v880
      %v882 = vpop.xlane.xlu0 %881
      %v883 = vmin.f32 %v862, %v863
      %884 = vmin.xlane.f32.xlu0 %v883
      %v885 = vpop.xlane.xlu0 %884
      %v886 = vmin.f32 %v864, %v865
      %887 = vmin.xlane.f32.xlu0 %v886
      %v888 = vpop.xlane.xlu0 %887
      %v889 = vmin.f32 %v866, %v867
      %890 = vmin.xlane.f32.xlu0 %v889
      %v891 = vpop.xlane.xlu0 %890
      %v892 = vmin.f32 %v868, %v869
      %893 = vmin.xlane.f32.xlu0 %v892
      %v894 = vpop.xlane.xlu0 %893
      %v895 = vmin.f32 %v870, %v871
      %896 = vmin.xlane.f32.xlu0 %v895
      %v897 = vpop.xlane.xlu0 %896
      %v898 = vmin.f32 %v872, %v873
      %899 = vmin.xlane.f32.xlu0 %v898
      %v900 = vpop.xlane.xlu0 %899
      %v901 = vmin.f32 %v874, %v875
      %902 = vmin.xlane.f32.xlu0 %v901
      %v903 = vpop.xlane.xlu0 %902
      %v904 = vmin.f32 %v876, %v877
      %905 = vmin.xlane.f32.xlu0 %v904
      %v906 = vpop.xlane.xlu0 %905
      %v907 = vmin.f32 %v878, %v879
      %908 = vmin.xlane.f32.xlu0 %v907
      %v909 = vpop.xlane.xlu0 %908
      %v910 = vmin.f32 %v882, %v885
      %v911 = vrot.slane %v910, 4
      %v912 = vmin.f32 %v910, %v911
      %v913 = vrot.slane %v912, 2
      %v914 = vmin.f32 %v912, %v913
      %v915 = vrot.slane %v914, 1
      %v916 = vmin.f32 %v914, %v915
      %v917 = vmin.f32 %v888, %v891
      %v918 = vrot.slane %v917, 4
      %v919 = vmin.f32 %v917, %v918
      %v920 = vrot.slane %v919, 2
      %v921 = vmin.f32 %v919, %v920
      %v922 = vrot.slane %v921, 1
      %v923 = vmin.f32 %v921, %v922
      %v924 = vmin.f32 %v894, %v897
      %v925 = vrot.slane %v924, 4
      %v926 = vmin.f32 %v924, %v925
      %v927 = vrot.slane %v926, 2
      %v928 = vmin.f32 %v926, %v927
      %v929 = vrot.slane %v928, 1
      %v930 = vmin.f32 %v928, %v929
      %v931 = vmin.f32 %v900, %v903
      %v932 = vrot.slane %v931, 4
      %v933 = vmin.f32 %v931, %v932
      %v934 = vrot.slane %v933, 2
      %v935 = vmin.f32 %v933, %v934
      %v936 = vrot.slane %v935, 1
      %v937 = vmin.f32 %v935, %v936
      %v938 = vmin.f32 %v906, %v909
      %v939 = vrot.slane %v938, 4
      %v940 = vmin.f32 %v938, %v939
      %v941 = vrot.slane %v940, 2
      %v942 = vmin.f32 %v940, %v941
      %v943 = vrot.slane %v942, 1
      %v944 = vmin.f32 %v942, %v943
      %v945 = vsub.f32 %v860, %v916
      %v946 = vsub.f32 %v861, %v916
      %v947 = vsub.f32 %v862, %v916
      %v948 = vsub.f32 %v863, %v916
      %v949 = vsub.f32 %v864, %v923
      %v950 = vsub.f32 %v865, %v923
      %v951 = vsub.f32 %v866, %v923
      %v952 = vsub.f32 %v867, %v923
      %v953 = vsub.f32 %v868, %v930
      %v954 = vsub.f32 %v869, %v930
      %v955 = vsub.f32 %v870, %v930
      %v956 = vsub.f32 %v871, %v930
      %v957 = vsub.f32 %v872, %v937
      %v958 = vsub.f32 %v873, %v937
      %v959 = vsub.f32 %v874, %v937
      %v960 = vsub.f32 %v875, %v937
      %v961 = vsub.f32 %v876, %v944
      %v962 = vsub.f32 %v877, %v944
      %v963 = vsub.f32 %v878, %v944
      %v964 = vsub.f32 %v879, %v944
      %v965 = vmax.f32 %v945, %v946
      %966 = vmax.xlane.f32.xlu0 %v965
      %v967 = vpop.xlane.xlu0 %966
      %v968 = vmax.f32 %v947, %v948
      %969 = vmax.xlane.f32.xlu0 %v968
      %v970 = vpop.xlane.xlu0 %969
      %v971 = vmax.f32 %v949, %v950
      %972 = vmax.xlane.f32.xlu0 %v971
      %v973 = vpop.xlane.xlu0 %972
      %v974 = vmax.f32 %v951, %v952
      %975 = vmax.xlane.f32.xlu0 %v974
      %v976 = vpop.xlane.xlu0 %975
      %v977 = vmax.f32 %v953, %v954
      %978 = vmax.xlane.f32.xlu0 %v977
      %v979 = vpop.xlane.xlu0 %978
      %v980 = vmax.f32 %v955, %v956
      %981 = vmax.xlane.f32.xlu0 %v980
      %v982 = vpop.xlane.xlu0 %981
      %v983 = vmax.f32 %v957, %v958
      %984 = vmax.xlane.f32.xlu0 %v983
      %v985 = vpop.xlane.xlu0 %984
      %v986 = vmax.f32 %v959, %v960
      %987 = vmax.xlane.f32.xlu0 %v986
      %v988 = vpop.xlane.xlu0 %987
      %v989 = vmax.f32 %v961, %v962
      %990 = vmax.xlane.f32.xlu0 %v989
      %v991 = vpop.xlane.xlu0 %990
      %v992 = vmax.f32 %v963, %v964
      %993 = vmax.xlane.f32.xlu0 %v992
      %v994 = vpop.xlane.xlu0 %993
      %v995 = vmax.f32 %v967, %v970
      %v996 = vrot.slane %v995, 4
      %v997 = vmax.f32 %v995, %v996
      %v998 = vrot.slane %v997, 2
      %v999 = vmax.f32 %v997, %v998
      %v1000 = vrot.slane %v999, 1
      %v1001 = vmax.f32 %v999, %v1000
      %v1002 = vmax.f32 %v973, %v976
      %v1003 = vrot.slane %v1002, 4
      %v1004 = vmax.f32 %v1002, %v1003
      %v1005 = vrot.slane %v1004, 2
      %v1006 = vmax.f32 %v1004, %v1005
      %v1007 = vrot.slane %v1006, 1
      %v1008 = vmax.f32 %v1006, %v1007
      %v1009 = vmax.f32 %v979, %v982
      %v1010 = vrot.slane %v1009, 4
      %v1011 = vmax.f32 %v1009, %v1010
      %v1012 = vrot.slane %v1011, 2
      %v1013 = vmax.f32 %v1011, %v1012
      %v1014 = vrot.slane %v1013, 1
      %v1015 = vmax.f32 %v1013, %v1014
      %v1016 = vmax.f32 %v985, %v988
      %v1017 = vrot.slane %v1016, 4
      %v1018 = vmax.f32 %v1016, %v1017
      %v1019 = vrot.slane %v1018, 2
      %v1020 = vmax.f32 %v1018, %v1019
      %v1021 = vrot.slane %v1020, 1
      %v1022 = vmax.f32 %v1020, %v1021
      %v1023 = vmax.f32 %v991, %v994
      %v1024 = vrot.slane %v1023, 4
      %v1025 = vmax.f32 %v1023, %v1024
      %v1026 = vrot.slane %v1025, 2
      %v1027 = vmax.f32 %v1025, %v1026
      %v1028 = vrot.slane %v1027, 1
      %v1029 = vmax.f32 %v1027, %v1028
      %v1030 = vadd.f32 %v1001, 1e-15
      %v1031 = vadd.f32 %v1008, 1e-15
      %v1032 = vadd.f32 %v1015, 1e-15
      %v1033 = vadd.f32 %v1022, 1e-15
      %v1034 = vadd.f32 %v1029, 1e-15
      %v1035 = vrcp.pop %v1030
      %v1036 = vmul.f32 1.0, %v1035
      %v1037 = vrcp.pop %v1031
      %v1038 = vmul.f32 1.0, %v1037
      %v1039 = vrcp.pop %v1032
      %v1040 = vmul.f32 1.0, %v1039
      %v1041 = vrcp.pop %v1033
      %v1042 = vmul.f32 1.0, %v1041
      %v1043 = vrcp.pop %v1034
      %v1044 = vmul.f32 1.0, %v1043
      %v1045 = vmul.f32 %v945, %v1036
      %v1046 = vmul.f32 %v946, %v1036
      %v1047 = vmul.f32 %v947, %v1036
      %v1048 = vmul.f32 %v948, %v1036
      %v1049 = vmul.f32 %v949, %v1038
      %v1050 = vmul.f32 %v950, %v1038
      %v1051 = vmul.f32 %v951, %v1038
      %v1052 = vmul.f32 %v952, %v1038
      %v1053 = vmul.f32 %v953, %v1040
      %v1054 = vmul.f32 %v954, %v1040
      %v1055 = vmul.f32 %v955, %v1040
      %v1056 = vmul.f32 %v956, %v1040
      %v1057 = vmul.f32 %v957, %v1042
      %v1058 = vmul.f32 %v958, %v1042
      %v1059 = vmul.f32 %v959, %v1042
      %v1060 = vmul.f32 %v960, %v1042
      %v1061 = vmul.f32 %v961, %v1044
      %v1062 = vmul.f32 %v962, %v1044
      %v1063 = vmul.f32 %v963, %v1044
      %v1064 = vmul.f32 %v964, %v1044
      %v1065 = vmax.f32 %v1045, %v1047
      %v1066 = vrot.slane %v1065, 4
      %v1067 = vmax.f32 %v1065, %v1066
      %v1068 = vrot.slane %v1067, 2
      %v1069 = vmax.f32 %v1067, %v1068
      %v1070 = vrot.slane %v1069, 1
      %v1071 = vmax.f32 %v1069, %v1070
      %v1072 = vmax.f32 %v1046, %v1048
      %v1073 = vrot.slane %v1072, 4
      %v1074 = vmax.f32 %v1072, %v1073
      %v1075 = vrot.slane %v1074, 2
      %v1076 = vmax.f32 %v1074, %v1075
      %v1077 = vrot.slane %v1076, 1
      %v1078 = vmax.f32 %v1076, %v1077
      %v1079 = vmax.f32 %v1049, %v1051
      %v1080 = vrot.slane %v1079, 4
      %v1081 = vmax.f32 %v1079, %v1080
      %v1082 = vrot.slane %v1081, 2
      %v1083 = vmax.f32 %v1081, %v1082
      %v1084 = vrot.slane %v1083, 1
      %v1085 = vmax.f32 %v1083, %v1084
      %v1086 = vmax.f32 %v1050, %v1052
      %v1087 = vrot.slane %v1086, 4
      %v1088 = vmax.f32 %v1086, %v1087
      %v1089 = vrot.slane %v1088, 2
      %v1090 = vmax.f32 %v1088, %v1089
      %v1091 = vrot.slane %v1090, 1
      %v1092 = vmax.f32 %v1090, %v1091
      %v1093 = vmax.f32 %v1053, %v1055
      %v1094 = vrot.slane %v1093, 4
      %v1095 = vmax.f32 %v1093, %v1094
      %v1096 = vrot.slane %v1095, 2
      %v1097 = vmax.f32 %v1095, %v1096
      %v1098 = vrot.slane %v1097, 1
      %v1099 = vmax.f32 %v1097, %v1098
      %v1100 = vmax.f32 %v1054, %v1056
      %v1101 = vrot.slane %v1100, 4
      %v1102 = vmax.f32 %v1100, %v1101
      %v1103 = vrot.slane %v1102, 2
      %v1104 = vmax.f32 %v1102, %v1103
      %v1105 = vrot.slane %v1104, 1
      %v1106 = vmax.f32 %v1104, %v1105
      %v1107 = vmax.f32 %v1057, %v1059
      %v1108 = vrot.slane %v1107, 4
      %v1109 = vmax.f32 %v1107, %v1108
      %v1110 = vrot.slane %v1109, 2
      %v1111 = vmax.f32 %v1109, %v1110
      %v1112 = vrot.slane %v1111, 1
      %v1113 = vmax.f32 %v1111, %v1112
      %v1114 = vmax.f32 %v1058, %v1060
      %v1115 = vrot.slane %v1114, 4
      %v1116 = vmax.f32 %v1114, %v1115
      %v1117 = vrot.slane %v1116, 2
      %v1118 = vmax.f32 %v1116, %v1117
      %v1119 = vrot.slane %v1118, 1
      %v1120 = vmax.f32 %v1118, %v1119
      %v1121 = vmax.f32 %v1061, %v1063
      %v1122 = vrot.slane %v1121, 4
      %v1123 = vmax.f32 %v1121, %v1122
      %v1124 = vrot.slane %v1123, 2
      %v1125 = vmax.f32 %v1123, %v1124
      %v1126 = vrot.slane %v1125, 1
      %v1127 = vmax.f32 %v1125, %v1126
      %v1128 = vmax.f32 %v1062, %v1064
      %v1129 = vrot.slane %v1128, 4
      %v1130 = vmax.f32 %v1128, %v1129
      %v1131 = vrot.slane %v1130, 2
      %v1132 = vmax.f32 %v1130, %v1131
      %v1133 = vrot.slane %v1132, 1
      %v1134 = vmax.f32 %v1132, %v1133
      %v1135 = vadd.f32 %v1045, %v1047
      %v1136 = vrot.slane %v1135, 4
      %v1137 = vadd.f32 %v1135, %v1136
      %v1138 = vrot.slane %v1137, 2
      %v1139 = vadd.f32 %v1137, %v1138
      %v1140 = vrot.slane %v1139, 1
      %v1141 = vadd.f32 %v1139, %v1140
      %v1142 = vadd.f32 %v1046, %v1048
      %v1143 = vrot.slane %v1142, 4
      %v1144 = vadd.f32 %v1142, %v1143
      %v1145 = vrot.slane %v1144, 2
      %v1146 = vadd.f32 %v1144, %v1145
      %v1147 = vrot.slane %v1146, 1
      %v1148 = vadd.f32 %v1146, %v1147
      %v1149 = vadd.f32 %v1049, %v1051
      %v1150 = vrot.slane %v1149, 4
      %v1151 = vadd.f32 %v1149, %v1150
      %v1152 = vrot.slane %v1151, 2
      %v1153 = vadd.f32 %v1151, %v1152
      %v1154 = vrot.slane %v1153, 1
      %v1155 = vadd.f32 %v1153, %v1154
      %v1156 = vadd.f32 %v1050, %v1052
      %v1157 = vrot.slane %v1156, 4
      %v1158 = vadd.f32 %v1156, %v1157
      %v1159 = vrot.slane %v1158, 2
      %v1160 = vadd.f32 %v1158, %v1159
      %v1161 = vrot.slane %v1160, 1
      %v1162 = vadd.f32 %v1160, %v1161
      %v1163 = vadd.f32 %v1053, %v1055
      %v1164 = vrot.slane %v1163, 4
      %v1165 = vadd.f32 %v1163, %v1164
      %v1166 = vrot.slane %v1165, 2
      %v1167 = vadd.f32 %v1165, %v1166
      %v1168 = vrot.slane %v1167, 1
      %v1169 = vadd.f32 %v1167, %v1168
      %v1170 = vadd.f32 %v1054, %v1056
      %v1171 = vrot.slane %v1170, 4
      %v1172 = vadd.f32 %v1170, %v1171
      %v1173 = vrot.slane %v1172, 2
      %v1174 = vadd.f32 %v1172, %v1173
      %v1175 = vrot.slane %v1174, 1
      %v1176 = vadd.f32 %v1174, %v1175
      %v1177 = vadd.f32 %v1057, %v1059
      %v1178 = vrot.slane %v1177, 4
      %v1179 = vadd.f32 %v1177, %v1178
      %v1180 = vrot.slane %v1179, 2
      %v1181 = vadd.f32 %v1179, %v1180
      %v1182 = vrot.slane %v1181, 1
      %v1183 = vadd.f32 %v1181, %v1182
      %v1184 = vadd.f32 %v1058, %v1060
      %v1185 = vrot.slane %v1184, 4
      %v1186 = vadd.f32 %v1184, %v1185
      %v1187 = vrot.slane %v1186, 2
      %v1188 = vadd.f32 %v1186, %v1187
      %v1189 = vrot.slane %v1188, 1
      %v1190 = vadd.f32 %v1188, %v1189
      %v1191 = vadd.f32 %v1061, %v1063
      %v1192 = vrot.slane %v1191, 4
      %v1193 = vadd.f32 %v1191, %v1192
      %v1194 = vrot.slane %v1193, 2
      %v1195 = vadd.f32 %v1193, %v1194
      %v1196 = vrot.slane %v1195, 1
      %v1197 = vadd.f32 %v1195, %v1196
      %v1198 = vadd.f32 %v1062, %v1064
      %v1199 = vrot.slane %v1198, 4
      %v1200 = vadd.f32 %v1198, %v1199
      %v1201 = vrot.slane %v1200, 2
      %v1202 = vadd.f32 %v1200, %v1201
      %v1203 = vrot.slane %v1202, 1
      %v1204 = vadd.f32 %v1202, %v1203
      %v1205 = vrcp.pop 16.0
      %v1206 = vmul.f32 %v1141, %v1205
      %v1207 = vmul.f32 %v1148, %v1205
      %v1208 = vmul.f32 %v1155, %v1205
      %v1209 = vmul.f32 %v1162, %v1205
      %v1210 = vmul.f32 %v1169, %v1205
      %v1211 = vmul.f32 %v1176, %v1205
      %v1212 = vmul.f32 %v1183, %v1205
      %v1213 = vmul.f32 %v1190, %v1205
      %v1214 = vmul.f32 %v1197, %v1205
      %v1215 = vmul.f32 %v1204, %v1205
      %v1216 = vld [vmem:[%s5] sm:$0x3]
      %v1217 = vld [vmem:[%s6] sm:$0x3]
      %1219 = vset.pattern.permute.xlu0 0
      %1220 = vperm.xlu0 %1219, %v1216
      %v1221 = vpop.permute.xlu0 %1220
      %v1223 = vmul.f32 %v1221, %v1071
      %v1224 = vmul.f32 %v1221, %v1078
      %1226 = vset.pattern.permute.xlu0 0
      %1227 = vperm.xlu0 %1226, %v1217
      %v1228 = vpop.permute.xlu0 %1227
      %v1230 = vadd.f32 %v1228, %v1223
      %v1231 = vadd.f32 %v1228, %v1224
      %1232 = vset.pattern.permute.xlu0 5
      %1233 = vperm.xlu0 %1232, %v1216
      %v1234 = vpop.permute.xlu0 %1233
      %v1236 = vmul.f32 %v1234, %v1206
      %v1237 = vmul.f32 %v1234, %v1207
      %v1238 = vadd.f32 %v1230, %v1236
      %v1239 = vadd.f32 %v1231, %v1237
      %1240 = vset.pattern.permute.xlu0 1
      %1241 = vperm.xlu0 %1240, %v1216
      %v1242 = vpop.permute.xlu0 %1241
      %v1244 = vmul.f32 %v1242, %v1085
      %v1245 = vmul.f32 %v1242, %v1092
      %v1246 = vadd.f32 %v1238, %v1244
      %v1247 = vadd.f32 %v1239, %v1245
      %1248 = vset.pattern.permute.xlu0 6
      %1249 = vperm.xlu0 %1248, %v1216
      %v1250 = vpop.permute.xlu0 %1249
      %v1252 = vmul.f32 %v1250, %v1208
      %v1253 = vmul.f32 %v1250, %v1209
      %v1254 = vadd.f32 %v1246, %v1252
      %v1255 = vadd.f32 %v1247, %v1253
      %1256 = vset.pattern.permute.xlu0 2
      %1257 = vperm.xlu0 %1256, %v1216
      %v1258 = vpop.permute.xlu0 %1257
      %v1260 = vmul.f32 %v1258, %v1099
      %v1261 = vmul.f32 %v1258, %v1106
      %v1262 = vadd.f32 %v1254, %v1260
      %v1263 = vadd.f32 %v1255, %v1261
      %1264 = vset.pattern.permute.xlu0 7
      %1265 = vperm.xlu0 %1264, %v1216
      %v1266 = vpop.permute.xlu0 %1265
      %v1268 = vmul.f32 %v1266, %v1210
      %v1269 = vmul.f32 %v1266, %v1211
      %v1270 = vadd.f32 %v1262, %v1268
      %v1271 = vadd.f32 %v1263, %v1269
      %1272 = vset.pattern.permute.xlu0 3
      %1273 = vperm.xlu0 %1272, %v1216
      %v1274 = vpop.permute.xlu0 %1273
      %v1276 = vmul.f32 %v1274, %v1113
      %v1277 = vmul.f32 %v1274, %v1120
      %v1278 = vadd.f32 %v1270, %v1276
      %v1279 = vadd.f32 %v1271, %v1277
      %1280 = vset.pattern.permute.xlu0 8
      %1281 = vperm.xlu0 %1280, %v1216
      %v1282 = vpop.permute.xlu0 %1281
      %v1284 = vmul.f32 %v1282, %v1212
      %v1285 = vmul.f32 %v1282, %v1213
      %v1286 = vadd.f32 %v1278, %v1284
      %v1287 = vadd.f32 %v1279, %v1285
      %1288 = vset.pattern.permute.xlu0 4
      %1289 = vperm.xlu0 %1288, %v1216
      %v1290 = vpop.permute.xlu0 %1289
      %v1292 = vmul.f32 %v1290, %v1127
      %v1293 = vmul.f32 %v1290, %v1134
      %v1294 = vadd.f32 %v1286, %v1292
      %v1295 = vadd.f32 %v1287, %v1293
      %1296 = vset.pattern.permute.xlu0 9
      %1297 = vperm.xlu0 %1296, %v1216
      %v1298 = vpop.permute.xlu0 %1297
      %v1300 = vmul.f32 %v1298, %v1214
      %v1301 = vmul.f32 %v1298, %v1215
      %v1302 = vadd.f32 %v1294, %v1300
      %v1303 = vadd.f32 %v1295, %v1301
      %v1304 = vmax.f32 %v1302, 0.0
      %v1305 = vmax.f32 %v1303, 0.0
      %v1306 = vmin.f32 %v1304, 1.0
      %v1307 = vmin.f32 %v1305, 1.0
      %v1308 = vmul.f32 %v1306, 2.0
      %v1309 = vmul.f32 %v1307, 2.0
      %v1310 = vsub.f32 %v1308, 1.0
      %v1311 = vsub.f32 %v1309, 1.0
      %v1314 = vcombine.low %v1310, %v1311
      %v1316 = vunpack.c.l.s4 1983009808
      %v1317 = vunpack.c.0.s8 %v1316
      %v1318 = vlaneseq
      %v1319 = vshrl.u32 %v1318, 7
      %v1320 = vsub.s32 %v1317, %v1319
      %v1321 = vrot.slane %v1314, %v1320
      %1323 = vst [vmem:[%s318] sm:$0xf] %v1321
      %p1324 = scmp.lt.s32.totalorder %s18, 1
      %s1325 = scalar_select %p1324, %s18, 1
      %s1326 = smul.addr %s1325, 2
      %s1327 = smul.addr %s1326, 2
      %s1328 = scalar_lea.vmem %s7, %s1327
      // Predicated region
      $region49: #{deepvoxels_forward.1} parent=47 // pred_check
        %p1329 = pneg %p198
      $region50: #{deepvoxels_forward.1} parent=47 // pred_check_branch
        %1331 = sbr.rel (%p1329) target = $region52
      $region51: #{deepvoxels_forward.1} parent=47 // pred_region
        _
      $region52: #{deepvoxels_forward.1} parent=47 // pred_fallthru
        _
    $region48: #{deepvoxels_forward.1} parent=5 // pred_fallthru
      _
    %p1332 = scmp.le.s32.totalorder 2, %s13
    // Predicated region
    $region53: #{deepvoxels_forward.1} parent=5 // pred_check
      %p1333 = pneg %p1332
    $region54: #{deepvoxels_forward.1} parent=5 // pred_check_branch
      %1335 = sbr.rel (%p1333) target = $region56
    $region55: #{deepvoxels_forward.1} parent=5 // pred_region
      %s1336 = ssub.s32 %s13, 2
      // Predicated region
      $region57: #{deepvoxels_forward.1} parent=55 // pred_check
        %p1337 = pneg %p204
      $region58: #{deepvoxels_forward.1} parent=55 // pred_check_branch
        %1339 = sbr.rel (%p1337) target = $region60
      $region59: #{deepvoxels_forward.1} parent=55 // pred_region
        %p1340 = scmp.lt.s32.totalorder %s19, 1
        %s1341 = scalar_select %p1340, %s19, 1
        %s1342 = smul.addr %s1341, 2
        %s1343 = smul.addr %s1342, 2
        %s1344 = scalar_lea.vmem %s7, %s1343
      $region60: #{deepvoxels_forward.1} parent=55 // pred_fallthru
        _
    $region56: #{deepvoxels_forward.1} parent=5 // pred_fallthru
      _
  $region6: #{deepvoxels_forward.1} parent=0 // loop_footer
    %s17 = sadd.s32 1, %s13
  $region7: #{deepvoxels_forward.1} parent=0 // loop_footer_branch
    %12 = sbr.rel target = $region3
  $region8: #{deepvoxels_forward.1} parent=0 // loop_exit
    _

</llo_original>
